<compile_context>
chip_gen: v5e
topology: v5e:2x2
jax: 0.10.0
libtpu: 0.0.40
codegen_flags: <defaults>
</compile_context>

<pallas_src>
import functools

import numpy as np
import jax
import jax.numpy as jnp
from jax.experimental import pallas as pl
from jax.experimental.pallas import tpu as pltpu

# ---- hyperparameters (stand-ins for `opt` / kwargs) -------------------------
EMBEDDING_SIZE = 16          # opt.EmbeddingSize (Dim)
KERNEL_NUM = 8               # opt.kernel_num  (Knum)
KERNEL_SIZES = (2, 3, 4)     # opt.kernel_sizes (Ks)
BAG_SIZE = 50                # kwargs['bag_size']
VALUES_NUM = 10              # kwargs['values_num']
SEQ_LEN = 12                 # length of embedd_batch sequence
BATCH = 64                   # small demo batch (grid still gets >=2 steps)

HIDDEN = (256, 128, 64, 32, 2)

N_BRANCH = len(KERNEL_SIZES)
N_FEAT = N_BRANCH * KERNEL_NUM                                  # 24 real feats
N_FEAT_PAD = 32                                                 # lane-friendly
T_PAD = pl.next_power_of_2(SEQ_LEN - min(KERNEL_SIZES) + 1)     # 16
BAND_COLS = T_PAD * N_FEAT_PAD                                  # 512 = 4*128
IN_EMB = SEQ_LEN * EMBEDDING_SIZE                               # 192
ONES_COL = IN_EMB                                               # 192
VALS_COL0 = ONES_COL + 1                                        # 193
IN_WIDTH = 208                                                  # 203 -> 208
H1 = HIDDEN[0]                                                  # 256
WBIG_COLS = BAND_COLS + H1                                      # 768
OUT_PAD = 128                                                   # lane-dense out
NEG_INF = -1e30


# ----------------------------- Pallas kernel --------------------------------
def cnn_kernel(x_ref,
               wbig_ref, w1a_ref,
               w2_ref, b2_ref, w3_ref, b3_ref, w4_ref, b4_ref,
               w5_ref, b5_ref,
               o_ref):
    # One (bb,208)x(208,768) bf16 matmul, f32 accumulation:
    #   cols [0,512)   : all conv branches at all (padded) time positions,
    #                    conv bias folded in via the ones column,
    #                    padded time slots carry -1e30.
    #   cols [512,768) : values @ W1b + b1 (also via the ones column).
    slab = jnp.dot(x_ref[...], wbig_ref[...],
                   preferred_element_type=jnp.float32)          # (bb, 768) f32
    band = slab[:, :BAND_COLS]                                  # lane-aligned
    h_vals = slab[:, BAND_COLS:]                                # (bb, 256) f32

    # Max over T_PAD time positions (columns are [t, feat]-major, feat=32).
    x = band
    half = BAND_COLS
    while half > N_FEAT_PAD:
        half //= 2
        x = jnp.maximum(x[:, :half], x[:, half:2 * half])
    # relu(max(conv+b)) == max(relu(conv+b))  (relu monotone) == torch order
    pooled = jnp.maximum(x, 0.0)                                # (bb, 32) f32

    # concat(pooled, values) @ W1 + b1 : pooled part here, values part + bias
    # already computed in h_vals by the big matmul.
    h = jnp.dot(pooled.astype(jnp.bfloat16), w1a_ref[...],
                preferred_element_type=jnp.float32) + h_vals
    h = jnp.maximum(h, 0.0)                      # relu(relu(.)) == relu(.)

    for w_ref, b_ref in ((w2_ref, b2_ref), (w3_ref, b3_ref),
                         (w4_ref, b4_ref), (w5_ref, b5_ref)):
        h = jnp.dot(h.astype(jnp.bfloat16), w_ref[...],
                    preferred_element_type=jnp.float32)
        h = jnp.maximum(h + b_ref[...], 0.0)     # final ReLU matches the module

    o_ref[...] = h.astype(o_ref.dtype)           # (bb, 128) bf16, lane-dense


# ------------------------------ parameters ----------------------------------
def init_params(key):
    keys = jax.random.split(key, 1 + 2 * len(KERNEL_SIZES) + 2 * 5)
    ki = iter(keys)
    params = {}
    params["emb_table"] = (
        jax.random.normal(next(ki), (BAG_SIZE, EMBEDDING_SIZE), jnp.float32) * 0.1)
    convs = []
    for k in KERNEL_SIZES:
        w = jax.random.normal(next(ki), (KERNEL_NUM, k, EMBEDDING_SIZE),
                              jnp.float32) * 0.1
        b = jax.random.normal(next(ki), (1, KERNEL_NUM), jnp.float32) * 0.1
        convs.append((w, b))
    params["convs"] = convs
    dims = (N_FEAT + VALUES_NUM,) + HIDDEN
    linears = []
    for i in range(5):
        w = jax.random.normal(next(ki), (dims[i], dims[i + 1]), jnp.float32) * 0.1
        b = jax.random.normal(next(ki), (1, dims[i + 1]), jnp.float32) * 0.1
        linears.append((w, b))
    params["linears"] = linears
    return params


def pack_params(params):
    """Host-side weight layout prep (done once, off the hot path)."""
    dim, knum = EMBEDDING_SIZE, KERNEL_NUM
    linears = [(np.asarray(w), np.asarray(b)) for w, b in params["linears"]]
    w1, b1 = linears[0]

    # Consolidated first-matmul weight (IN_WIDTH, 512 + 256).
    wbig = np.zeros((IN_WIDTH, WBIG_COLS), np.float32)
    for br, (ksize, (w, b)) in enumerate(zip(KERNEL_SIZES, params["convs"])):
        w = np.asarray(w)                                   # (Knum, K, Dim)
        b = np.asarray(b)                                   # (1, Knum)
        t_len = SEQ_LEN - ksize + 1
        for t in range(T_PAD):
            col0 = t * N_FEAT_PAD + br * knum
            if t < t_len:
                wbig[ONES_COL, col0:col0 + knum] = b[0]     # conv bias
                for k in range(ksize):
                    row0 = (t + k) * dim
                    wbig[row0:row0 + dim, col0:col0 + knum] = w[:, k, :].T
            else:
                wbig[ONES_COL, col0:col0 + knum] = NEG_INF  # padded time slot
    # (padded feature columns 24..31 of each t-group stay all-zero -> pooled 0)
    # values @ W1b + b1 part:
    wbig[ONES_COL, BAND_COLS:] = b1[0]
    wbig[VALS_COL0:VALS_COL0 + VALUES_NUM, BAND_COLS:] = w1[N_FEAT:, :]

    # pooled @ W1a with the pooled width padded 24 -> 32 (zero rows).
    w1a = np.zeros((N_FEAT_PAD, H1), np.float32)
    w1a[:N_FEAT, :] = w1[:N_FEAT, :]

    # Last linear padded to 128 output lanes (unmasked lane-dense store).
    w5, b5 = linears[4]
    w5p = np.zeros((w5.shape[0], OUT_PAD), np.float32)
    w5p[:, :w5.shape[1]] = w5
    b5p = np.zeros((1, OUT_PAD), np.float32)
    b5p[:, :b5.shape[1]] = b5

    bf = lambda a: jnp.asarray(a, jnp.bfloat16)
    f32 = lambda a: jnp.asarray(a, jnp.float32)
    return {
        "emb_table": f32(params["emb_table"]),
        "weights": (
            bf(wbig), bf(w1a),
            bf(linears[1][0]), f32(linears[1][1]),
            bf(linears[2][0]), f32(linears[2][1]),
            bf(linears[3][0]), f32(linears[3][1]),
            bf(w5p), f32(b5p),
        ),
    }


# ------------------------------- forward ------------------------------------
def _round_up(x, m):
    return (x + m - 1) // m * m


@functools.partial(jax.jit, static_argnames=("block_b",))
def class_cnn_forward(value_batch, embedd_batch, packed, *, block_b=1024):
    b = value_batch.shape[0]

    # Embedding lookup (gather) + consolidated input row build is XLA glue:
    # [emb(192) | 1.0 | values(10) | 0-pad -> 208], cast to bf16.
    emb = packed["emb_table"][embedd_batch]                     # (B, L, Dim) f32
    xin = jnp.concatenate(
        [emb.reshape(b, IN_EMB),
         jnp.ones((b, 1), jnp.float32),
         value_batch.astype(jnp.float32),
         jnp.zeros((b, IN_WIDTH - VALS_COL0 - VALUES_NUM), jnp.float32)],
        axis=1).astype(jnp.bfloat16)                            # (B, 208) bf16

    # Batch tile: multiple of 16 (bf16 sublane packing); split so the grid has
    # >=2 steps when possible (v7x megacore gets both TensorCores busy).
    bb = min(block_b, _round_up(b, 16))
    bb = _round_up(bb, 16)
    if _round_up(b, bb) == bb and b > 16:
        bb = _round_up(pl.cdiv(b, 2), 16)
    b_pad = _round_up(b, bb)
    if b_pad != b:
        xin = jnp.pad(xin, ((0, b_pad - b), (0, 0)))

    weights = packed["weights"]
    const_spec = lambda arr: pl.BlockSpec(arr.shape, lambda i: (0, 0))

    out = pl.pallas_call(
        cnn_kernel,
        grid=(b_pad // bb,),
        in_specs=[pl.BlockSpec((bb, IN_WIDTH), lambda i: (i, 0))]
                 + [const_spec(w) for w in weights],
        out_specs=pl.BlockSpec((bb, OUT_PAD), lambda i: (i, 0)),
        out_shape=jax.ShapeDtypeStruct((b_pad, OUT_PAD), jnp.bfloat16),
        compiler_params=pltpu.CompilerParams(
            dimension_semantics=("parallel",)),      # 2-TC sharding on v7x
    )(xin, *weights)

    return out[:b, :HIDDEN[-1]].astype(jnp.float32)


# ------------------------------ reference -----------------------------------
def reference_forward(value_batch, embedd_batch, params):
    # Mirrors the PyTorch module with the same precision policy as the kernel
    # (bf16 matmul inputs, f32 accumulation / element-wise ops).
    emb = params["emb_table"][embedd_batch].astype(jnp.bfloat16)
    pooled = []
    for ksize, (w, bias) in zip(KERNEL_SIZES, params["convs"]):
        t_len = SEQ_LEN - ksize + 1
        acc = jnp.zeros((emb.shape[0], t_len, KERNEL_NUM), jnp.float32)
        for k in range(ksize):
            acc = acc + jax.lax.dot_general(
                emb[:, k:k + t_len, :], w[:, k, :].astype(jnp.bfloat16),
                dimension_numbers=(((2,), (1,)), ((), ())),
                preferred_element_type=jnp.float32)
        acc = jnp.maximum(acc + bias, 0.0)
        pooled.append(jnp.max(acc, axis=1))
    h = jnp.concatenate(pooled + [value_batch], axis=1)
    for w, bias in params["linears"]:
        h = jnp.dot(h.astype(jnp.bfloat16), w.astype(jnp.bfloat16),
                    preferred_element_type=jnp.float32)
        h = jnp.maximum(h + bias, 0.0)
    return h


if __name__ == "__main__":
    key = jax.random.PRNGKey(0)
    kp, kv, ke = jax.random.split(key, 3)
    params = init_params(kp)
    packed = pack_params(params)

    value_batch = jax.random.normal(kv, (BATCH, VALUES_NUM), jnp.float32)
    embedd_batch = jax.random.randint(ke, (BATCH, SEQ_LEN), 0, BAG_SIZE)

    # block_b=32 -> a 2-step batch grid even at this small demo batch size.
    out = class_cnn_forward(value_batch, embedd_batch, packed, block_b=32)
    out = jax.block_until_ready(out)

    ref = reference_forward(value_batch, embedd_batch, params)
    assert out.shape == (BATCH, HIDDEN[-1]), out.shape
    assert jnp.allclose(out, ref, atol=2e-2, rtol=2e-2), (
        float(jnp.max(jnp.abs(out - ref))))
    print("KERNEL_OK")
</pallas_src>

<mosaic_0001>
module attributes {stable_mosaic.version = 11 : i64} {
  func.func @cnn_kernel(%arg0: i32, %arg1: memref<32x208xbf16, #tpu.memory_space<vmem>>, %arg2: memref<208x768xbf16, #tpu.memory_space<vmem>>, %arg3: memref<32x256xbf16, #tpu.memory_space<vmem>>, %arg4: memref<256x128xbf16, #tpu.memory_space<vmem>>, %arg5: memref<1x128xf32, #tpu.memory_space<vmem>>, %arg6: memref<128x64xbf16, #tpu.memory_space<vmem>>, %arg7: memref<1x64xf32, #tpu.memory_space<vmem>>, %arg8: memref<64x32xbf16, #tpu.memory_space<vmem>>, %arg9: memref<1x32xf32, #tpu.memory_space<vmem>>, %arg10: memref<32x128xbf16, #tpu.memory_space<vmem>>, %arg11: memref<1x128xf32, #tpu.memory_space<vmem>>, %arg12: memref<32x128xbf16, #tpu.memory_space<vmem>>) attributes {dimension_semantics = [#tpu.dimension_semantics<parallel>], iteration_bounds = array<i64: 2>, scalar_prefetch = 0 : i64, scratch_operands = 0 : i64, tpu.core_type = #tpu.core_type<tc>, window_params = [{transform_indices = @transform_0, window_bounds = array<i64: 32, 208>}, {pipeline_mode = #tpu.pipeline_mode<synchronous>, transform_indices = @transform_1, window_bounds = array<i64: 208, 768>}, {pipeline_mode = #tpu.pipeline_mode<synchronous>, transform_indices = @transform_2, window_bounds = array<i64: 32, 256>}, {pipeline_mode = #tpu.pipeline_mode<synchronous>, transform_indices = @transform_3, window_bounds = array<i64: 256, 128>}, {pipeline_mode = #tpu.pipeline_mode<synchronous>, transform_indices = @transform_4, window_bounds = array<i64: 1, 128>}, {pipeline_mode = #tpu.pipeline_mode<synchronous>, transform_indices = @transform_5, window_bounds = array<i64: 128, 64>}, {pipeline_mode = #tpu.pipeline_mode<synchronous>, transform_indices = @transform_6, window_bounds = array<i64: 1, 64>}, {pipeline_mode = #tpu.pipeline_mode<synchronous>, transform_indices = @transform_7, window_bounds = array<i64: 64, 32>}, {pipeline_mode = #tpu.pipeline_mode<synchronous>, transform_indices = @transform_8, window_bounds = array<i64: 1, 32>}, {pipeline_mode = #tpu.pipeline_mode<synchronous>, transform_indices = @transform_9, window_bounds = array<i64: 32, 128>}, {pipeline_mode = #tpu.pipeline_mode<synchronous>, transform_indices = @transform_10, window_bounds = array<i64: 1, 128>}, {transform_indices = @transform_11, window_bounds = array<i64: 32, 128>}]} {
    %c0 = arith.constant 0 : index
    %c0_0 = arith.constant 0 : index
    %0 = vector.load %arg1[%c0, %c0_0] : memref<32x208xbf16, #tpu.memory_space<vmem>>, vector<32x208xbf16>
    %c0_1 = arith.constant 0 : index
    %c0_2 = arith.constant 0 : index
    %1 = vector.load %arg2[%c0_1, %c0_2] : memref<208x768xbf16, #tpu.memory_space<vmem>>, vector<208x768xbf16>
    %cst = arith.constant dense<0.000000e+00> : vector<32x768xf32>
    %2 = tpu.matmul %0, %1, %cst {dimension_numbers = #tpu.dot_dimension_numbers<[1], [0], [0], [1], [0, 0, 1, 1], [], []>} : vector<32x208xbf16>, vector<208x768xbf16>, vector<32x768xf32> -> vector<32x768xf32>
    %3 = vector.extract_strided_slice %2 {offsets = [0, 0], sizes = [32, 512], strides = [1, 1]} : vector<32x768xf32> to vector<32x512xf32>
    %4 = vector.extract_strided_slice %2 {offsets = [0, 512], sizes = [32, 256], strides = [1, 1]} : vector<32x768xf32> to vector<32x256xf32>
    %5 = vector.extract_strided_slice %3 {offsets = [0, 0], sizes = [32, 256], strides = [1, 1]} : vector<32x512xf32> to vector<32x256xf32>
    %6 = vector.extract_strided_slice %3 {offsets = [0, 256], sizes = [32, 256], strides = [1, 1]} : vector<32x512xf32> to vector<32x256xf32>
    %7 = arith.maximumf %5, %6 : vector<32x256xf32>
    %8 = vector.extract_strided_slice %7 {offsets = [0, 0], sizes = [32, 128], strides = [1, 1]} : vector<32x256xf32> to vector<32x128xf32>
    %9 = vector.extract_strided_slice %7 {offsets = [0, 128], sizes = [32, 128], strides = [1, 1]} : vector<32x256xf32> to vector<32x128xf32>
    %10 = arith.maximumf %8, %9 : vector<32x128xf32>
    %11 = vector.extract_strided_slice %10 {offsets = [0, 0], sizes = [32, 64], strides = [1, 1]} : vector<32x128xf32> to vector<32x64xf32>
    %12 = vector.extract_strided_slice %10 {offsets = [0, 64], sizes = [32, 64], strides = [1, 1]} : vector<32x128xf32> to vector<32x64xf32>
    %13 = arith.maximumf %11, %12 : vector<32x64xf32>
    %14 = vector.extract_strided_slice %13 {offsets = [0, 0], sizes = [32, 32], strides = [1, 1]} : vector<32x64xf32> to vector<32x32xf32>
    %15 = vector.extract_strided_slice %13 {offsets = [0, 32], sizes = [32, 32], strides = [1, 1]} : vector<32x64xf32> to vector<32x32xf32>
    %16 = arith.maximumf %14, %15 : vector<32x32xf32>
    %cst_3 = arith.constant 0.000000e+00 : f32
    %17 = vector.broadcast %cst_3 : f32 to vector<32x32xf32>
    %18 = arith.maximumf %16, %17 : vector<32x32xf32>
    %19 = arith.truncf %18 : vector<32x32xf32> to vector<32x32xbf16>
    %c0_4 = arith.constant 0 : index
    %c0_5 = arith.constant 0 : index
    %20 = vector.load %arg3[%c0_4, %c0_5] : memref<32x256xbf16, #tpu.memory_space<vmem>>, vector<32x256xbf16>
    %cst_6 = arith.constant dense<0.000000e+00> : vector<32x256xf32>
    %21 = tpu.matmul %19, %20, %cst_6 {dimension_numbers = #tpu.dot_dimension_numbers<[1], [0], [0], [1], [0, 0, 1, 1], [], []>} : vector<32x32xbf16>, vector<32x256xbf16>, vector<32x256xf32> -> vector<32x256xf32>
    %22 = arith.addf %21, %4 : vector<32x256xf32>
    %cst_7 = arith.constant 0.000000e+00 : f32
    %23 = vector.broadcast %cst_7 : f32 to vector<32x256xf32>
    %24 = arith.maximumf %22, %23 : vector<32x256xf32>
    %25 = arith.truncf %24 : vector<32x256xf32> to vector<32x256xbf16>
    %c0_8 = arith.constant 0 : index
    %c0_9 = arith.constant 0 : index
    %26 = vector.load %arg4[%c0_8, %c0_9] : memref<256x128xbf16, #tpu.memory_space<vmem>>, vector<256x128xbf16>
    %cst_10 = arith.constant dense<0.000000e+00> : vector<32x128xf32>
    %27 = tpu.matmul %25, %26, %cst_10 {dimension_numbers = #tpu.dot_dimension_numbers<[1], [0], [0], [1], [0, 0, 1, 1], [], []>} : vector<32x256xbf16>, vector<256x128xbf16>, vector<32x128xf32> -> vector<32x128xf32>
    %c0_11 = arith.constant 0 : index
    %c0_12 = arith.constant 0 : index
    %28 = vector.load %arg5[%c0_11, %c0_12] : memref<1x128xf32, #tpu.memory_space<vmem>>, vector<1x128xf32>
    %29 = vector.broadcast %28 : vector<1x128xf32> to vector<32x128xf32>
    %30 = arith.addf %27, %29 : vector<32x128xf32>
    %cst_13 = arith.constant 0.000000e+00 : f32
    %31 = vector.broadcast %cst_13 : f32 to vector<32x128xf32>
    %32 = arith.maximumf %30, %31 : vector<32x128xf32>
    %33 = arith.truncf %32 : vector<32x128xf32> to vector<32x128xbf16>
    %c0_14 = arith.constant 0 : index
    %c0_15 = arith.constant 0 : index
    %34 = vector.load %arg6[%c0_14, %c0_15] : memref<128x64xbf16, #tpu.memory_space<vmem>>, vector<128x64xbf16>
    %cst_16 = arith.constant dense<0.000000e+00> : vector<32x64xf32>
    %35 = tpu.matmul %33, %34, %cst_16 {dimension_numbers = #tpu.dot_dimension_numbers<[1], [0], [0], [1], [0, 0, 1, 1], [], []>} : vector<32x128xbf16>, vector<128x64xbf16>, vector<32x64xf32> -> vector<32x64xf32>
    %c0_17 = arith.constant 0 : index
    %c0_18 = arith.constant 0 : index
    %36 = vector.load %arg7[%c0_17, %c0_18] : memref<1x64xf32, #tpu.memory_space<vmem>>, vector<1x64xf32>
    %37 = vector.broadcast %36 : vector<1x64xf32> to vector<32x64xf32>
    %38 = arith.addf %35, %37 : vector<32x64xf32>
    %cst_19 = arith.constant 0.000000e+00 : f32
    %39 = vector.broadcast %cst_19 : f32 to vector<32x64xf32>
    %40 = arith.maximumf %38, %39 : vector<32x64xf32>
    %41 = arith.truncf %40 : vector<32x64xf32> to vector<32x64xbf16>
    %c0_20 = arith.constant 0 : index
    %c0_21 = arith.constant 0 : index
    %42 = vector.load %arg8[%c0_20, %c0_21] : memref<64x32xbf16, #tpu.memory_space<vmem>>, vector<64x32xbf16>
    %cst_22 = arith.constant dense<0.000000e+00> : vector<32x32xf32>
    %43 = tpu.matmul %41, %42, %cst_22 {dimension_numbers = #tpu.dot_dimension_numbers<[1], [0], [0], [1], [0, 0, 1, 1], [], []>} : vector<32x64xbf16>, vector<64x32xbf16>, vector<32x32xf32> -> vector<32x32xf32>
    %c0_23 = arith.constant 0 : index
    %c0_24 = arith.constant 0 : index
    %44 = vector.load %arg9[%c0_23, %c0_24] : memref<1x32xf32, #tpu.memory_space<vmem>>, vector<1x32xf32>
    %45 = vector.broadcast %44 : vector<1x32xf32> to vector<32x32xf32>
    %46 = arith.addf %43, %45 : vector<32x32xf32>
    %cst_25 = arith.constant 0.000000e+00 : f32
    %47 = vector.broadcast %cst_25 : f32 to vector<32x32xf32>
    %48 = arith.maximumf %46, %47 : vector<32x32xf32>
    %49 = arith.truncf %48 : vector<32x32xf32> to vector<32x32xbf16>
    %c0_26 = arith.constant 0 : index
    %c0_27 = arith.constant 0 : index
    %50 = vector.load %arg10[%c0_26, %c0_27] : memref<32x128xbf16, #tpu.memory_space<vmem>>, vector<32x128xbf16>
    %cst_28 = arith.constant dense<0.000000e+00> : vector<32x128xf32>
    %51 = tpu.matmul %49, %50, %cst_28 {dimension_numbers = #tpu.dot_dimension_numbers<[1], [0], [0], [1], [0, 0, 1, 1], [], []>} : vector<32x32xbf16>, vector<32x128xbf16>, vector<32x128xf32> -> vector<32x128xf32>
    %c0_29 = arith.constant 0 : index
    %c0_30 = arith.constant 0 : index
    %52 = vector.load %arg11[%c0_29, %c0_30] : memref<1x128xf32, #tpu.memory_space<vmem>>, vector<1x128xf32>
    %53 = vector.broadcast %52 : vector<1x128xf32> to vector<32x128xf32>
    %54 = arith.addf %51, %53 : vector<32x128xf32>
    %cst_31 = arith.constant 0.000000e+00 : f32
    %55 = vector.broadcast %cst_31 : f32 to vector<32x128xf32>
    %56 = arith.maximumf %54, %55 : vector<32x128xf32>
    %57 = arith.truncf %56 : vector<32x128xf32> to vector<32x128xbf16>
    %c0_32 = arith.constant 0 : index
    %c0_33 = arith.constant 0 : index
    %58 = vector.load %arg12[%c0_32, %c0_33] : memref<32x128xbf16, #tpu.memory_space<vmem>>, vector<32x128xbf16>
    tpu.vector_store %arg12[%c0_32, %c0_33], %57 {strides = array<i32>} : memref<32x128xbf16, #tpu.memory_space<vmem>>, vector<32x128xbf16>,
    return
  }
  func.func @transform_0(%arg0: i32) -> (i32, i32) {
    %c0_i32 = arith.constant 0 : i32
    %c0_i32_0 = arith.constant 0 : i32
    return %arg0, %c0_i32 : i32, i32
  }
  func.func @transform_1(%arg0: i32) -> (i32, i32) {
    %c0_i32 = arith.constant 0 : i32
    %c0_i32_0 = arith.constant 0 : i32
    %c0_i32_1 = arith.constant 0 : i32
    return %c0_i32, %c0_i32_0 : i32, i32
  }
  func.func @transform_2(%arg0: i32) -> (i32, i32) {
    %c0_i32 = arith.constant 0 : i32
    %c0_i32_0 = arith.constant 0 : i32
    %c0_i32_1 = arith.constant 0 : i32
    return %c0_i32, %c0_i32_0 : i32, i32
  }
  func.func @transform_3(%arg0: i32) -> (i32, i32) {
    %c0_i32 = arith.constant 0 : i32
    %c0_i32_0 = arith.constant 0 : i32
    %c0_i32_1 = arith.constant 0 : i32
    return %c0_i32, %c0_i32_0 : i32, i32
  }
  func.func @transform_4(%arg0: i32) -> (i32, i32) {
    %c0_i32 = arith.constant 0 : i32
    %c0_i32_0 = arith.constant 0 : i32
    %c0_i32_1 = arith.constant 0 : i32
    return %c0_i32, %c0_i32_0 : i32, i32
  }
  func.func @transform_5(%arg0: i32) -> (i32, i32) {
    %c0_i32 = arith.constant 0 : i32
    %c0_i32_0 = arith.constant 0 : i32
    %c0_i32_1 = arith.constant 0 : i32
    return %c0_i32, %c0_i32_0 : i32, i32
  }
  func.func @transform_6(%arg0: i32) -> (i32, i32) {
    %c0_i32 = arith.constant 0 : i32
    %c0_i32_0 = arith.constant 0 : i32
    %c0_i32_1 = arith.constant 0 : i32
    return %c0_i32, %c0_i32_0 : i32, i32
  }
  func.func @transform_7(%arg0: i32) -> (i32, i32) {
    %c0_i32 = arith.constant 0 : i32
    %c0_i32_0 = arith.constant 0 : i32
    %c0_i32_1 = arith.constant 0 : i32
    return %c0_i32, %c0_i32_0 : i32, i32
  }
  func.func @transform_8(%arg0: i32) -> (i32, i32) {
    %c0_i32 = arith.constant 0 : i32
    %c0_i32_0 = arith.constant 0 : i32
    %c0_i32_1 = arith.constant 0 : i32
    return %c0_i32, %c0_i32_0 : i32, i32
  }
  func.func @transform_9(%arg0: i32) -> (i32, i32) {
    %c0_i32 = arith.constant 0 : i32
    %c0_i32_0 = arith.constant 0 : i32
    %c0_i32_1 = arith.constant 0 : i32
    return %c0_i32, %c0_i32_0 : i32, i32
  }
  func.func @transform_10(%arg0: i32) -> (i32, i32) {
    %c0_i32 = arith.constant 0 : i32
    %c0_i32_0 = arith.constant 0 : i32
    %c0_i32_1 = arith.constant 0 : i32
    return %c0_i32, %c0_i32_0 : i32, i32
  }
  func.func @transform_11(%arg0: i32) -> (i32, i32) {
    %c0_i32 = arith.constant 0 : i32
    %c0_i32_0 = arith.constant 0 : i32
    return %arg0, %c0_i32 : i32, i32
  }
}

</mosaic_0001>

<llo_original>
// kernel: class_cnn_forward.1
$region0: #{class_cnn_forward.1}
  #allocation0 [shape = 'u32[]', space=smem, size = 0x4, offset = 0x4, fixed_abs, tag = 'smem constant byte address 0x4 - core index']
  #allocation1 [shape = 'u32[72,128]{1,0:T(1,128)}', space=vmem, size = 0x9000, scoped, tag = 'internal scratch']
  %s0 = inlined_call_operand.vmem [shape: bf16[64,208], index: 0, kind: input, shape index: {}]
  %s1 = inlined_call_operand.vmem [shape: bf16[208,768], index: 1, kind: input, shape index: {}]
  %s2 = inlined_call_operand.vmem [shape: bf16[32,256], index: 2, kind: input, shape index: {}]
  %s3 = inlined_call_operand.vmem [shape: bf16[256,128], index: 3, kind: input, shape index: {}]
  %s4 = inlined_call_operand.vmem [shape: f32[1,128], index: 4, kind: input, shape index: {}]
  %s5 = inlined_call_operand.vmem [shape: bf16[128,64], index: 5, kind: input, shape index: {}]
  %s6 = inlined_call_operand.vmem [shape: f32[1,64], index: 6, kind: input, shape index: {}]
  %s7 = inlined_call_operand.vmem [shape: bf16[64,32], index: 7, kind: input, shape index: {}]
  %s8 = inlined_call_operand.vmem [shape: f32[1,32], index: 8, kind: input, shape index: {}]
  %s9 = inlined_call_operand.vmem [shape: bf16[32,128], index: 9, kind: input, shape index: {}]
  %s10 = inlined_call_operand.vmem [shape: f32[1,128], index: 10, kind: input, shape index: {}]
  %s11 = inlined_call_operand.vmem [shape: bf16[64,128], index: 11, kind: output, shape index: {}]
  %s12 = sld [smem:[#allocation0]]
  $region77: #{class_cnn_forward.1} parent=0
    _
  %s14 = ssub.s32 1, %s12
  %s15 = scalar_select 0, %s14, %s12
  loop: start=0, step=1, limit=4
  $region2: #{class_cnn_forward.1} parent=0 // loop_pre_header
    _
  $region3: #{class_cnn_forward.1} parent=0 // loop_header
    %s17 = sphi 0, %s21
    %p18 = scmp.ge.s32.totalorder %s17, 4
    %s27 = sphi 0, %s29
    %s30 = sphi 0, %s27
    %s31 = sphi 0, %s30
    %s47 = sphi 0, %s31
    %s51 = sphi 0, %s51
    %s53 = sphi 0, %s51
    %s54 = sphi 0, %s53
    %s68 = sphi 0, %s54
    %s72 = sphi 0, %s72
    %s74 = sphi 0, %s72
    %s75 = sphi 0, %s74
    %s89 = sphi 0, %s75
    %s93 = sphi 0, %s93
    %s95 = sphi 0, %s93
    %s96 = sphi 0, %s95
    %s110 = sphi 0, %s96
    %s114 = sphi 0, %s114
    %s116 = sphi 0, %s114
    %s117 = sphi 0, %s116
    %s131 = sphi 0, %s117
    %s135 = sphi 0, %s135
    %s137 = sphi 0, %s135
    %s138 = sphi 0, %s137
    %s152 = sphi 0, %s138
    %s156 = sphi 0, %s156
    %s158 = sphi 0, %s156
    %s159 = sphi 0, %s158
    %s173 = sphi 0, %s159
    %s177 = sphi 0, %s177
    %s179 = sphi 0, %s177
    %s180 = sphi 0, %s179
    %s194 = sphi 0, %s180
    %s198 = sphi 0, %s198
    %s200 = sphi 0, %s198
    %s201 = sphi 0, %s200
    %s215 = sphi 0, %s201
    %s219 = sphi 0, %s219
    %s221 = sphi 0, %s219
    %s222 = sphi 0, %s221
    %s236 = sphi 0, %s222
    %s240 = sphi 0, %s240
    %s242 = sphi 0, %s240
    %s243 = sphi 0, %s242
    %s257 = sphi 0, %s243
    %s263 = sphi 0, %s265
    %s266 = sphi 0, %s263
    %s267 = sphi 0, %s266
    %s283 = sphi 0, %s267
  $region4: #{class_cnn_forward.1} parent=0 // loop_header_branch
    %20 = sbr.rel (%p18) target = $region8
  $region5: #{class_cnn_forward.1} parent=0 // loop_body
    %s22 = ssub.s32 %s17, 1
    %s23 = ssub.s32 %s17, 2
    %s24 = sadd.s32 %s17, 1
    %s25 = ssub.s32 %s17, %s24
    %p26 = scmp.eq.s32.totalorder %s25, 0
    %s28 = sadd.s32 %s27, 1
    %s29 = scalar_select %p26, %s27, %s28
    %p32 = pneg %p26
    %p33 = scmp.eq.s32.totalorder %s17, 1
    %p34 = por %p32, %p33
    %p35 = scmp.ne.s32.totalorder %s27, %s30
    %p36 = scmp.eq.s32.totalorder %s17, 0
    %p37 = por %p35, %p36
    %p38 = scmp.ne.s32.totalorder %s27, %s30
    %p39 = scmp.eq.s32.totalorder %s22, 1
    %p40 = por %p38, %p39
    %p41 = scmp.ne.s32.totalorder %s30, %s31
    %p42 = scmp.eq.s32.totalorder %s22, 0
    %p43 = por %p41, %p42
    %p44 = scmp.ne.s32.totalorder %s30, %s31
    %p45 = scmp.eq.s32.totalorder %s23, 1
    %p46 = por %p44, %p45
    %p48 = scmp.ne.s32.totalorder %s31, %s47
    %p49 = scmp.eq.s32.totalorder %s23, 0
    %p50 = por %p48, %p49
    %s52 = sadd.s32 %s51, 1
    %p55 = scmp.eq.s32.totalorder %s17, 1
    %p56 = scmp.ne.s32.totalorder %s51, %s53
    %p57 = scmp.eq.s32.totalorder %s17, 0
    %p58 = por %p56, %p57
    %p59 = scmp.ne.s32.totalorder %s51, %s53
    %p60 = scmp.eq.s32.totalorder %s22, 1
    %p61 = por %p59, %p60
    %p62 = scmp.ne.s32.totalorder %s53, %s54
    %p63 = scmp.eq.s32.totalorder %s22, 0
    %p64 = por %p62, %p63
    %p65 = scmp.ne.s32.totalorder %s53, %s54
    %p66 = scmp.eq.s32.totalorder %s23, 1
    %p67 = por %p65, %p66
    %p69 = scmp.ne.s32.totalorder %s54, %s68
    %p70 = scmp.eq.s32.totalorder %s23, 0
    %p71 = por %p69, %p70
    %s73 = sadd.s32 %s72, 1
    %p76 = scmp.eq.s32.totalorder %s17, 1
    %p77 = scmp.ne.s32.totalorder %s72, %s74
    %p78 = scmp.eq.s32.totalorder %s17, 0
    %p79 = por %p77, %p78
    %p80 = scmp.ne.s32.totalorder %s72, %s74
    %p81 = scmp.eq.s32.totalorder %s22, 1
    %p82 = por %p80, %p81
    %p83 = scmp.ne.s32.totalorder %s74, %s75
    %p84 = scmp.eq.s32.totalorder %s22, 0
    %p85 = por %p83, %p84
    %p86 = scmp.ne.s32.totalorder %s74, %s75
    %p87 = scmp.eq.s32.totalorder %s23, 1
    %p88 = por %p86, %p87
    %p90 = scmp.ne.s32.totalorder %s75, %s89
    %p91 = scmp.eq.s32.totalorder %s23, 0
    %p92 = por %p90, %p91
    %s94 = sadd.s32 %s93, 1
    %p97 = scmp.eq.s32.totalorder %s17, 1
    %p98 = scmp.ne.s32.totalorder %s93, %s95
    %p99 = scmp.eq.s32.totalorder %s17, 0
    %p100 = por %p98, %p99
    %p101 = scmp.ne.s32.totalorder %s93, %s95
    %p102 = scmp.eq.s32.totalorder %s22, 1
    %p103 = por %p101, %p102
    %p104 = scmp.ne.s32.totalorder %s95, %s96
    %p105 = scmp.eq.s32.totalorder %s22, 0
    %p106 = por %p104, %p105
    %p107 = scmp.ne.s32.totalorder %s95, %s96
    %p108 = scmp.eq.s32.totalorder %s23, 1
    %p109 = por %p107, %p108
    %p111 = scmp.ne.s32.totalorder %s96, %s110
    %p112 = scmp.eq.s32.totalorder %s23, 0
    %p113 = por %p111, %p112
    %s115 = sadd.s32 %s114, 1
    %p118 = scmp.eq.s32.totalorder %s17, 1
    %p119 = scmp.ne.s32.totalorder %s114, %s116
    %p120 = scmp.eq.s32.totalorder %s17, 0
    %p121 = por %p119, %p120
    %p122 = scmp.ne.s32.totalorder %s114, %s116
    %p123 = scmp.eq.s32.totalorder %s22, 1
    %p124 = por %p122, %p123
    %p125 = scmp.ne.s32.totalorder %s116, %s117
    %p126 = scmp.eq.s32.totalorder %s22, 0
    %p127 = por %p125, %p126
    %p128 = scmp.ne.s32.totalorder %s116, %s117
    %p129 = scmp.eq.s32.totalorder %s23, 1
    %p130 = por %p128, %p129
    %p132 = scmp.ne.s32.totalorder %s117, %s131
    %p133 = scmp.eq.s32.totalorder %s23, 0
    %p134 = por %p132, %p133
    %s136 = sadd.s32 %s135, 1
    %p139 = scmp.eq.s32.totalorder %s17, 1
    %p140 = scmp.ne.s32.totalorder %s135, %s137
    %p141 = scmp.eq.s32.totalorder %s17, 0
    %p142 = por %p140, %p141
    %p143 = scmp.ne.s32.totalorder %s135, %s137
    %p144 = scmp.eq.s32.totalorder %s22, 1
    %p145 = por %p143, %p144
    %p146 = scmp.ne.s32.totalorder %s137, %s138
    %p147 = scmp.eq.s32.totalorder %s22, 0
    %p148 = por %p146, %p147
    %p149 = scmp.ne.s32.totalorder %s137, %s138
    %p150 = scmp.eq.s32.totalorder %s23, 1
    %p151 = por %p149, %p150
    %p153 = scmp.ne.s32.totalorder %s138, %s152
    %p154 = scmp.eq.s32.totalorder %s23, 0
    %p155 = por %p153, %p154
    %s157 = sadd.s32 %s156, 1
    %p160 = scmp.eq.s32.totalorder %s17, 1
    %p161 = scmp.ne.s32.totalorder %s156, %s158
    %p162 = scmp.eq.s32.totalorder %s17, 0
    %p163 = por %p161, %p162
    %p164 = scmp.ne.s32.totalorder %s156, %s158
    %p165 = scmp.eq.s32.totalorder %s22, 1
    %p166 = por %p164, %p165
    %p167 = scmp.ne.s32.totalorder %s158, %s159
    %p168 = scmp.eq.s32.totalorder %s22, 0
    %p169 = por %p167, %p168
    %p170 = scmp.ne.s32.totalorder %s158, %s159
    %p171 = scmp.eq.s32.totalorder %s23, 1
    %p172 = por %p170, %p171
    %p174 = scmp.ne.s32.totalorder %s159, %s173
    %p175 = scmp.eq.s32.totalorder %s23, 0
    %p176 = por %p174, %p175
    %s178 = sadd.s32 %s177, 1
    %p181 = scmp.eq.s32.totalorder %s17, 1
    %p182 = scmp.ne.s32.totalorder %s177, %s179
    %p183 = scmp.eq.s32.totalorder %s17, 0
    %p184 = por %p182, %p183
    %p185 = scmp.ne.s32.totalorder %s177, %s179
    %p186 = scmp.eq.s32.totalorder %s22, 1
    %p187 = por %p185, %p186
    %p188 = scmp.ne.s32.totalorder %s179, %s180
    %p189 = scmp.eq.s32.totalorder %s22, 0
    %p190 = por %p188, %p189
    %p191 = scmp.ne.s32.totalorder %s179, %s180
    %p192 = scmp.eq.s32.totalorder %s23, 1
    %p193 = por %p191, %p192
    %p195 = scmp.ne.s32.totalorder %s180, %s194
    %p196 = scmp.eq.s32.totalorder %s23, 0
    %p197 = por %p195, %p196
    %s199 = sadd.s32 %s198, 1
    %p202 = scmp.eq.s32.totalorder %s17, 1
    %p203 = scmp.ne.s32.totalorder %s198, %s200
    %p204 = scmp.eq.s32.totalorder %s17, 0
    %p205 = por %p203, %p204
    %p206 = scmp.ne.s32.totalorder %s198, %s200
    %p207 = scmp.eq.s32.totalorder %s22, 1
    %p208 = por %p206, %p207
    %p209 = scmp.ne.s32.totalorder %s200, %s201
    %p210 = scmp.eq.s32.totalorder %s22, 0
    %p211 = por %p209, %p210
    %p212 = scmp.ne.s32.totalorder %s200, %s201
    %p213 = scmp.eq.s32.totalorder %s23, 1
    %p214 = por %p212, %p213
    %p216 = scmp.ne.s32.totalorder %s201, %s215
    %p217 = scmp.eq.s32.totalorder %s23, 0
    %p218 = por %p216, %p217
    %s220 = sadd.s32 %s219, 1
    %p223 = scmp.eq.s32.totalorder %s17, 1
    %p224 = scmp.ne.s32.totalorder %s219, %s221
    %p225 = scmp.eq.s32.totalorder %s17, 0
    %p226 = por %p224, %p225
    %p227 = scmp.ne.s32.totalorder %s219, %s221
    %p228 = scmp.eq.s32.totalorder %s22, 1
    %p229 = por %p227, %p228
    %p230 = scmp.ne.s32.totalorder %s221, %s222
    %p231 = scmp.eq.s32.totalorder %s22, 0
    %p232 = por %p230, %p231
    %p233 = scmp.ne.s32.totalorder %s221, %s222
    %p234 = scmp.eq.s32.totalorder %s23, 1
    %p235 = por %p233, %p234
    %p237 = scmp.ne.s32.totalorder %s222, %s236
    %p238 = scmp.eq.s32.totalorder %s23, 0
    %p239 = por %p237, %p238
    %s241 = sadd.s32 %s240, 1
    %p244 = scmp.eq.s32.totalorder %s17, 1
    %p245 = scmp.ne.s32.totalorder %s240, %s242
    %p246 = scmp.eq.s32.totalorder %s17, 0
    %p247 = por %p245, %p246
    %p248 = scmp.ne.s32.totalorder %s240, %s242
    %p249 = scmp.eq.s32.totalorder %s22, 1
    %p250 = por %p248, %p249
    %p251 = scmp.ne.s32.totalorder %s242, %s243
    %p252 = scmp.eq.s32.totalorder %s22, 0
    %p253 = por %p251, %p252
    %p254 = scmp.ne.s32.totalorder %s242, %s243
    %p255 = scmp.eq.s32.totalorder %s23, 1
    %p256 = por %p254, %p255
    %p258 = scmp.ne.s32.totalorder %s243, %s257
    %p259 = scmp.eq.s32.totalorder %s23, 0
    %p260 = por %p258, %p259
    %s261 = ssub.s32 %s17, %s24
    %p262 = scmp.eq.s32.totalorder %s261, 0
    %s264 = sadd.s32 %s263, 1
    %s265 = scalar_select %p262, %s263, %s264
    %p268 = pneg %p262
    %p269 = scmp.eq.s32.totalorder %s17, 1
    %p270 = por %p268, %p269
    %p271 = scmp.ne.s32.totalorder %s263, %s266
    %p272 = scmp.eq.s32.totalorder %s17, 0
    %p273 = por %p271, %p272
    %p274 = scmp.ne.s32.totalorder %s263, %s266
    %p275 = scmp.eq.s32.totalorder %s22, 1
    %p276 = por %p274, %p275
    %p277 = scmp.ne.s32.totalorder %s266, %s267
    %p278 = scmp.eq.s32.totalorder %s22, 0
    %p279 = por %p277, %p278
    %p280 = scmp.ne.s32.totalorder %s266, %s267
    %p281 = scmp.eq.s32.totalorder %s23, 1
    %p282 = por %p280, %p281
    %p284 = scmp.ne.s32.totalorder %s267, %s283
    %p285 = scmp.eq.s32.totalorder %s23, 0
    %p286 = por %p284, %p285
    %p287 = scmp.le.s32.totalorder 1, %s17
    %p288 = scmp.lt.s32.totalorder %s17, 3
    %p289 = pnand %p287, %p288
    %p290 = pneg %p289
    // Predicated region
    $region9: #{class_cnn_forward.1} parent=5 // pred_check
      _
    $region10: #{class_cnn_forward.1} parent=5 // pred_check_branch
      %292 = sbr.rel (%p289) target = $region12
    $region11: #{class_cnn_forward.1} parent=5 // pred_region
      %s293 = ssub.s32 %s17, 1
      // Predicated region
      $region13: #{class_cnn_forward.1} parent=11 // pred_check
        %p294 = pneg %p64
      $region14: #{class_cnn_forward.1} parent=11 // pred_check_branch
        %296 = sbr.rel (%p294) target = $region16
      $region15: #{class_cnn_forward.1} parent=11 // pred_region
        _
      $region16: #{class_cnn_forward.1} parent=11 // pred_fallthru
        _
      // Predicated region
      $region17: #{class_cnn_forward.1} parent=11 // pred_check
        %p297 = pneg %p85
      $region18: #{class_cnn_forward.1} parent=11 // pred_check_branch
        %299 = sbr.rel (%p297) target = $region20
      $region19: #{class_cnn_forward.1} parent=11 // pred_region
        _
      $region20: #{class_cnn_forward.1} parent=11 // pred_fallthru
        _
      // Predicated region
      $region21: #{class_cnn_forward.1} parent=11 // pred_check
        %p300 = pneg %p106
      $region22: #{class_cnn_forward.1} parent=11 // pred_check_branch
        %302 = sbr.rel (%p300) target = $region24
      $region23: #{class_cnn_forward.1} parent=11 // pred_region
        _
      $region24: #{class_cnn_forward.1} parent=11 // pred_fallthru
        _
      // Predicated region
      $region25: #{class_cnn_forward.1} parent=11 // pred_check
        %p303 = pneg %p127
      $region26: #{class_cnn_forward.1} parent=11 // pred_check_branch
        %305 = sbr.rel (%p303) target = $region28
      $region27: #{class_cnn_forward.1} parent=11 // pred_region
        _
      $region28: #{class_cnn_forward.1} parent=11 // pred_fallthru
        _
      // Predicated region
      $region29: #{class_cnn_forward.1} parent=11 // pred_check
        %p306 = pneg %p148
      $region30: #{class_cnn_forward.1} parent=11 // pred_check_branch
        %308 = sbr.rel (%p306) target = $region32
      $region31: #{class_cnn_forward.1} parent=11 // pred_region
        _
      $region32: #{class_cnn_forward.1} parent=11 // pred_fallthru
        _
      // Predicated region
      $region33: #{class_cnn_forward.1} parent=11 // pred_check
        %p309 = pneg %p169
      $region34: #{class_cnn_forward.1} parent=11 // pred_check_branch
        %311 = sbr.rel (%p309) target = $region36
      $region35: #{class_cnn_forward.1} parent=11 // pred_region
        _
      $region36: #{class_cnn_forward.1} parent=11 // pred_fallthru
        _
      // Predicated region
      $region37: #{class_cnn_forward.1} parent=11 // pred_check
        %p312 = pneg %p190
      $region38: #{class_cnn_forward.1} parent=11 // pred_check_branch
        %314 = sbr.rel (%p312) target = $region40
      $region39: #{class_cnn_forward.1} parent=11 // pred_region
        _
      $region40: #{class_cnn_forward.1} parent=11 // pred_fallthru
        _
      // Predicated region
      $region41: #{class_cnn_forward.1} parent=11 // pred_check
        %p315 = pneg %p211
      $region42: #{class_cnn_forward.1} parent=11 // pred_check_branch
        %317 = sbr.rel (%p315) target = $region44
      $region43: #{class_cnn_forward.1} parent=11 // pred_region
        _
      $region44: #{class_cnn_forward.1} parent=11 // pred_fallthru
        _
      // Predicated region
      $region45: #{class_cnn_forward.1} parent=11 // pred_check
        %p318 = pneg %p232
      $region46: #{class_cnn_forward.1} parent=11 // pred_check_branch
        %320 = sbr.rel (%p318) target = $region48
      $region47: #{class_cnn_forward.1} parent=11 // pred_region
        _
      $region48: #{class_cnn_forward.1} parent=11 // pred_fallthru
        _
      // Predicated region
      $region49: #{class_cnn_forward.1} parent=11 // pred_check
        %p321 = pneg %p253
      $region50: #{class_cnn_forward.1} parent=11 // pred_check_branch
        %323 = sbr.rel (%p321) target = $region52
      $region51: #{class_cnn_forward.1} parent=11 // pred_region
        _
      $region52: #{class_cnn_forward.1} parent=11 // pred_fallthru
        _
    $region12: #{class_cnn_forward.1} parent=5 // pred_fallthru
      _
    %p324 = scmp.lt.s32.totalorder %s17, 2
    // Predicated region
    $region53: #{class_cnn_forward.1} parent=5 // pred_check
      %p325 = pneg %p324
    $region54: #{class_cnn_forward.1} parent=5 // pred_check_branch
      %327 = sbr.rel (%p325) target = $region56
    $region55: #{class_cnn_forward.1} parent=5 // pred_region
      // Predicated region
      $region57: #{class_cnn_forward.1} parent=55 // pred_check
        %p328 = pneg %p37
      $region58: #{class_cnn_forward.1} parent=55 // pred_check_branch
        %330 = sbr.rel (%p328) target = $region60
      $region59: #{class_cnn_forward.1} parent=55 // pred_region
        %s331 = smul.u32 4, %s17
        %p332 = scmp.lt.s32.totalorder %s331, 7
        %s333 = scalar_select %p332, %s331, 7
        %s334 = smul.addr %s333, 2
        %s335 = smul.addr %s334, 4
        %s336 = scalar_lea.vmem %s0, %s335
        %s337 = smul.u32 4, %s17
      $region60: #{class_cnn_forward.1} parent=55 // pred_fallthru
        _
    $region56: #{class_cnn_forward.1} parent=5 // pred_fallthru
      _
    %p338 = scmp.le.s32.totalorder 1, %s17
    %p339 = scmp.lt.s32.totalorder %s17, 3
    %p340 = pnand %p338, %p339
    %p341 = pneg %p340
    // Predicated region
    $region61: #{class_cnn_forward.1} parent=5 // pred_check
      _
    $region62: #{class_cnn_forward.1} parent=5 // pred_check_branch
      %343 = sbr.rel (%p340) target = $region64
    $region63: #{class_cnn_forward.1} parent=5 // pred_region
      %s344 = ssub.s32 %s17, 1
      %s345 = smul.u32 4, %s22
      %p346 = scmp.lt.s32.totalorder %s345, 7
      %s347 = scalar_select %p346, %s345, 7
      %s348 = smul.addr %s347, 2
      %s349 = smul.addr %s348, 4
      %s350 = scalar_lea.vmem %s0, %s349
      %p351 = pneg %p43
      %p352 = pneg %p40
      %p353 = pneg %p64
      %p354 = pneg %p61
      %p355 = pneg %p85
      %p356 = pneg %p82
      %p357 = pneg %p106
      %p358 = pneg %p103
      %p359 = pneg %p127
      %p360 = pneg %p124
      %p361 = pneg %p148
      %p362 = pneg %p145
      %p363 = pneg %p169
      %p364 = pneg %p166
      %p365 = pneg %p190
      %p366 = pneg %p187
      %p367 = pneg %p211
      %p368 = pneg %p208
      %p369 = pneg %p232
      %p370 = pneg %p229
      %p371 = pneg %p253
      %p372 = pneg %p250
      %p373 = pneg %p279
      %p374 = pneg %p276
      %s375 = smul.u32 4, %s22
      %p376 = scmp.lt.s32.totalorder %s375, 7
      %s377 = scalar_select %p376, %s375, 7
      %s378 = smul.addr %s377, 4
      %s379 = scalar_lea.vmem %s11, %s378
      %s380 = smul.u32 4, %s22
      %p381 = scmp.lt.s32.totalorder %s380, 7
      %s382 = scalar_select %p381, %s380, 7
      %s383 = smul.addr %s382, 2
      %s384 = smul.addr %s383, 4
      %s385 = scalar_lea.vmem %s0, %s384
      %s386 = smul.u32 4, %s22
      %s387 = smul.u32 4, %s22
      %p388 = scmp.lt.s32.totalorder %s387, 7
      %s389 = scalar_select %p388, %s387, 7
      %s390 = smul.addr %s389, 4
      %s391 = scalar_lea.vmem %s11, %s390
      %s392 = smul.u32 4, %s22
      %v394 = vld [vmem:[%s385] sm:$0xff]
      %v395 = vld [vmem:[%s385 + $0x8] sm:$0xff]
      %v396 = vld [vmem:[%s385 + $0x10] sm:$0xff]
      %v397 = vld [vmem:[%s385 + $0x18] sm:$0xff]
      %v398 = vld [vmem:[%s1] sm:$0xff]
      %v399 = vld [vmem:[%s1 + $0x8] sm:$0xff]
      %v400 = vld [vmem:[%s1 + $0x10] sm:$0xff]
      %v401 = vld [vmem:[%s1 + $0x18] sm:$0xff]
      %v402 = vld [vmem:[%s1 + $0x20] sm:$0xff]
      %v403 = vld [vmem:[%s1 + $0x28] sm:$0xff]
      %v404 = vld [vmem:[%s1 + $0x30] sm:$0xff]
      %v405 = vld [vmem:[%s1 + $0x38] sm:$0xff]
      %v406 = vld [vmem:[%s1 + $0x40] sm:$0xff]
      %v407 = vld [vmem:[%s1 + $0x48] sm:$0xff]
      %v408 = vld [vmem:[%s1 + $0x50] sm:$0xff]
      %v409 = vld [vmem:[%s1 + $0x58] sm:$0xff]
      %v410 = vld [vmem:[%s1 + $0x60] sm:$0xff]
      %v411 = vld [vmem:[%s1 + $0x68] sm:$0xff]
      %v412 = vld [vmem:[%s1 + $0x70] sm:$0xff]
      %v413 = vld [vmem:[%s1 + $0x78] sm:$0xff]
      %v414 = vld [vmem:[%s1 + $0x80] sm:$0xff]
      %v415 = vld [vmem:[%s1 + $0x88] sm:$0xff]
      %v416 = vld [vmem:[%s1 + $0x90] sm:$0xff]
      %v417 = vld [vmem:[%s1 + $0x98] sm:$0xff]
      %v418 = vld [vmem:[%s1 + $0xa0] sm:$0xff]
      %v419 = vld [vmem:[%s1 + $0xa8] sm:$0xff]
      %v420 = vld [vmem:[%s1 + $0xb0] sm:$0xff]
      %v421 = vld [vmem:[%s1 + $0xb8] sm:$0xff]
      %v422 = vld [vmem:[%s1 + $0xc0] sm:$0xff]
      %v423 = vld [vmem:[%s1 + $0xc8] sm:$0xff]
      %v424 = vld [vmem:[%s1 + $0xd0] sm:$0xff]
      %v425 = vld [vmem:[%s1 + $0xd8] sm:$0xff]
      %v426 = vld [vmem:[%s1 + $0xe0] sm:$0xff]
      %v427 = vld [vmem:[%s1 + $0xe8] sm:$0xff]
      %v428 = vld [vmem:[%s1 + $0xf0] sm:$0xff]
      %v429 = vld [vmem:[%s1 + $0xf8] sm:$0xff]
      %v430 = vld [vmem:[%s1 + $0x100] sm:$0xff]
      %v431 = vld [vmem:[%s1 + $0x108] sm:$0xff]
      %v432 = vld [vmem:[%s1 + $0x110] sm:$0xff]
      %v433 = vld [vmem:[%s1 + $0x118] sm:$0xff]
      %v434 = vld [vmem:[%s1 + $0x120] sm:$0xff]
      %v435 = vld [vmem:[%s1 + $0x128] sm:$0xff]
      %v436 = vld [vmem:[%s1 + $0x130] sm:$0xff]
      %v437 = vld [vmem:[%s1 + $0x138] sm:$0xff]
      %v438 = vld [vmem:[%s1 + $0x140] sm:$0xff]
      %v439 = vld [vmem:[%s1 + $0x148] sm:$0xff]
      %v440 = vld [vmem:[%s1 + $0x150] sm:$0xff]
      %v441 = vld [vmem:[%s1 + $0x158] sm:$0xff]
      %v442 = vld [vmem:[%s1 + $0x160] sm:$0xff]
      %v443 = vld [vmem:[%s1 + $0x168] sm:$0xff]
      %v444 = vld [vmem:[%s1 + $0x170] sm:$0xff]
      %v445 = vld [vmem:[%s1 + $0x178] sm:$0xff]
      %v446 = vld [vmem:[%s1 + $0x180] sm:$0xff]
      %v447 = vld [vmem:[%s1 + $0x188] sm:$0xff]
      %v448 = vld [vmem:[%s1 + $0x190] sm:$0xff]
      %v449 = vld [vmem:[%s1 + $0x198] sm:$0xff]
      %v450 = vld [vmem:[%s1 + $0x1a0] sm:$0xff]
      %v451 = vld [vmem:[%s1 + $0x1a8] sm:$0xff]
      %v452 = vld [vmem:[%s1 + $0x1b0] sm:$0xff]
      %v453 = vld [vmem:[%s1 + $0x1b8] sm:$0xff]
      %v454 = vld [vmem:[%s1 + $0x1c0] sm:$0xff]
      %v455 = vld [vmem:[%s1 + $0x1c8] sm:$0xff]
      %v456 = vld [vmem:[%s1 + $0x1d0] sm:$0xff]
      %v457 = vld [vmem:[%s1 + $0x1d8] sm:$0xff]
      %v458 = vld [vmem:[%s1 + $0x1e0] sm:$0xff]
      %v459 = vld [vmem:[%s1 + $0x1e8] sm:$0xff]
      %v460 = vld [vmem:[%s1 + $0x1f0] sm:$0xff]
      %v461 = vld [vmem:[%s1 + $0x1f8] sm:$0xff]
      %v462 = vld [vmem:[%s1 + $0x200] sm:$0xff]
      %v463 = vld [vmem:[%s1 + $0x208] sm:$0xff]
      %v464 = vld [vmem:[%s1 + $0x210] sm:$0xff]
      %v465 = vld [vmem:[%s1 + $0x218] sm:$0xff]
      %v466 = vld [vmem:[%s1 + $0x220] sm:$0xff]
      %v467 = vld [vmem:[%s1 + $0x228] sm:$0xff]
      %v468 = vld [vmem:[%s1 + $0x230] sm:$0xff]
      %v469 = vld [vmem:[%s1 + $0x238] sm:$0xff]
      %v470 = vld [vmem:[%s1 + $0x240] sm:$0xff]
      %v471 = vld [vmem:[%s1 + $0x248] sm:$0xff]
      %v472 = vld [vmem:[%s1 + $0x250] sm:$0xff]
      %v473 = vld [vmem:[%s1 + $0x258] sm:$0xff]
      %v474 = vld [vmem:[%s1 + $0x260] sm:$0xff]
      %v475 = vld [vmem:[%s1 + $0x268] sm:$0xff]
      %v480 = vunpack.c.l.b16 %v394
      %v481 = vunpack.c.h.b16 %v394
      %v482 = vunpack.c.l.b16 %v395
      %v483 = vunpack.c.h.b16 %v395
      %v484 = vunpack.c.l.b16 %v396
      %v485 = vunpack.c.h.b16 %v396
      %v486 = vunpack.c.l.b16 %v397
      %v487 = vunpack.c.h.b16 %v397
      %v488 = vpack.c.b16 %v482, %v480
      %v489 = vpack.c.b16 %v483, %v481
      %v490 = vpack.c.b16 %v486, %v484
      %v491 = vpack.c.b16 %v487, %v485
      %v572 = vunpack.c.l.b16 %v398
      %v573 = vunpack.c.h.b16 %v398
      %v574 = vunpack.c.l.b16 %v399
      %v575 = vunpack.c.h.b16 %v399
      %v576 = vunpack.c.l.b16 %v400
      %v577 = vunpack.c.h.b16 %v400
      %v578 = vunpack.c.l.b16 %v401
      %v579 = vunpack.c.h.b16 %v401
      %v580 = vunpack.c.l.b16 %v402
      %v581 = vunpack.c.h.b16 %v402
      %v582 = vunpack.c.l.b16 %v403
      %v583 = vunpack.c.h.b16 %v403
      %v584 = vunpack.c.l.b16 %v404
      %v585 = vunpack.c.h.b16 %v404
      %v586 = vunpack.c.l.b16 %v405
      %v587 = vunpack.c.h.b16 %v405
      %v588 = vunpack.c.l.b16 %v406
      %v589 = vunpack.c.h.b16 %v406
      %v590 = vunpack.c.l.b16 %v407
      %v591 = vunpack.c.h.b16 %v407
      %v592 = vunpack.c.l.b16 %v408
      %v593 = vunpack.c.h.b16 %v408
      %v594 = vunpack.c.l.b16 %v409
      %v595 = vunpack.c.h.b16 %v409
      %v596 = vunpack.c.l.b16 %v410
      %v597 = vunpack.c.h.b16 %v410
      %v598 = vunpack.c.l.b16 %v411
      %v599 = vunpack.c.h.b16 %v411
      %v600 = vunpack.c.l.b16 %v412
      %v601 = vunpack.c.h.b16 %v412
      %v602 = vunpack.c.l.b16 %v413
      %v603 = vunpack.c.h.b16 %v413
      %v604 = vunpack.c.l.b16 %v414
      %v605 = vunpack.c.h.b16 %v414
      %v606 = vunpack.c.l.b16 %v415
      %v607 = vunpack.c.h.b16 %v415
      %v608 = vunpack.c.l.b16 %v416
      %v609 = vunpack.c.h.b16 %v416
      %v610 = vunpack.c.l.b16 %v417
      %v611 = vunpack.c.h.b16 %v417
      %v612 = vunpack.c.l.b16 %v418
      %v613 = vunpack.c.h.b16 %v418
      %v614 = vunpack.c.l.b16 %v419
      %v615 = vunpack.c.h.b16 %v419
      %v616 = vunpack.c.l.b16 %v420
      %v617 = vunpack.c.h.b16 %v420
      %v618 = vunpack.c.l.b16 %v421
      %v619 = vunpack.c.h.b16 %v421
      %v620 = vunpack.c.l.b16 %v422
      %v621 = vunpack.c.h.b16 %v422
      %v622 = vunpack.c.l.b16 %v423
      %v623 = vunpack.c.h.b16 %v423
      %v624 = vunpack.c.l.b16 %v424
      %v625 = vunpack.c.h.b16 %v424
      %v626 = vunpack.c.l.b16 %v425
      %v627 = vunpack.c.h.b16 %v425
      %v628 = vunpack.c.l.b16 %v426
      %v629 = vunpack.c.h.b16 %v426
      %v630 = vunpack.c.l.b16 %v427
      %v631 = vunpack.c.h.b16 %v427
      %v632 = vunpack.c.l.b16 %v428
      %v633 = vunpack.c.h.b16 %v428
      %v634 = vunpack.c.l.b16 %v429
      %v635 = vunpack.c.h.b16 %v429
      %v636 = vunpack.c.l.b16 %v430
      %v637 = vunpack.c.h.b16 %v430
      %v638 = vunpack.c.l.b16 %v431
      %v639 = vunpack.c.h.b16 %v431
      %v640 = vunpack.c.l.b16 %v432
      %v641 = vunpack.c.h.b16 %v432
      %v642 = vunpack.c.l.b16 %v433
      %v643 = vunpack.c.h.b16 %v433
      %v644 = vunpack.c.l.b16 %v434
      %v645 = vunpack.c.h.b16 %v434
      %v646 = vunpack.c.l.b16 %v435
      %v647 = vunpack.c.h.b16 %v435
      %v648 = vunpack.c.l.b16 %v436
      %v649 = vunpack.c.h.b16 %v436
      %v650 = vunpack.c.l.b16 %v437
      %v651 = vunpack.c.h.b16 %v437
      %v652 = vunpack.c.l.b16 %v438
      %v653 = vunpack.c.h.b16 %v438
      %v654 = vunpack.c.l.b16 %v439
      %v655 = vunpack.c.h.b16 %v439
      %v656 = vunpack.c.l.b16 %v440
      %v657 = vunpack.c.h.b16 %v440
      %v658 = vunpack.c.l.b16 %v441
      %v659 = vunpack.c.h.b16 %v441
      %v660 = vunpack.c.l.b16 %v442
      %v661 = vunpack.c.h.b16 %v442
      %v662 = vunpack.c.l.b16 %v443
      %v663 = vunpack.c.h.b16 %v443
      %v664 = vunpack.c.l.b16 %v444
      %v665 = vunpack.c.h.b16 %v444
      %v666 = vunpack.c.l.b16 %v445
      %v667 = vunpack.c.h.b16 %v445
      %v668 = vunpack.c.l.b16 %v446
      %v669 = vunpack.c.h.b16 %v446
      %v670 = vunpack.c.l.b16 %v447
      %v671 = vunpack.c.h.b16 %v447
      %v672 = vunpack.c.l.b16 %v448
      %v673 = vunpack.c.h.b16 %v448
      %v674 = vunpack.c.l.b16 %v449
      %v675 = vunpack.c.h.b16 %v449
      %v676 = vunpack.c.l.b16 %v450
      %v677 = vunpack.c.h.b16 %v450
      %v678 = vunpack.c.l.b16 %v451
      %v679 = vunpack.c.h.b16 %v451
      %v680 = vunpack.c.l.b16 %v452
      %v681 = vunpack.c.h.b16 %v452
      %v682 = vunpack.c.l.b16 %v453
      %v683 = vunpack.c.h.b16 %v453
      %v684 = vunpack.c.l.b16 %v454
      %v685 = vunpack.c.h.b16 %v454
      %v686 = vunpack.c.l.b16 %v455
      %v687 = vunpack.c.h.b16 %v455
      %v688 = vunpack.c.l.b16 %v456
      %v689 = vunpack.c.h.b16 %v456
      %v690 = vunpack.c.l.b16 %v457
      %v691 = vunpack.c.h.b16 %v457
      %v692 = vunpack.c.l.b16 %v458
      %v693 = vunpack.c.h.b16 %v458
      %v694 = vunpack.c.l.b16 %v459
      %v695 = vunpack.c.h.b16 %v459
      %v696 = vunpack.c.l.b16 %v460
      %v697 = vunpack.c.h.b16 %v460
      %v698 = vunpack.c.l.b16 %v461
      %v699 = vunpack.c.h.b16 %v461
      %v700 = vunpack.c.l.b16 %v462
      %v701 = vunpack.c.h.b16 %v462
      %v702 = vunpack.c.l.b16 %v463
      %v703 = vunpack.c.h.b16 %v463
      %v704 = vunpack.c.l.b16 %v464
      %v705 = vunpack.c.h.b16 %v464
      %v706 = vunpack.c.l.b16 %v465
      %v707 = vunpack.c.h.b16 %v465
      %v708 = vunpack.c.l.b16 %v466
      %v709 = vunpack.c.h.b16 %v466
      %v710 = vunpack.c.l.b16 %v467
      %v711 = vunpack.c.h.b16 %v467
      %v712 = vunpack.c.l.b16 %v468
      %v713 = vunpack.c.h.b16 %v468
      %v714 = vunpack.c.l.b16 %v469
      %v715 = vunpack.c.h.b16 %v469
      %v716 = vunpack.c.l.b16 %v470
      %v717 = vunpack.c.h.b16 %v470
      %v718 = vunpack.c.l.b16 %v471
      %v719 = vunpack.c.h.b16 %v471
      %v720 = vunpack.c.l.b16 %v472
      %v721 = vunpack.c.h.b16 %v472
      %v722 = vunpack.c.l.b16 %v473
      %v723 = vunpack.c.h.b16 %v473
      %v724 = vunpack.c.l.b16 %v474
      %v725 = vunpack.c.h.b16 %v474
      %v726 = vunpack.c.l.b16 %v475
      %v727 = vunpack.c.h.b16 %v475
      %v728 = vpack.c.b16 %v578, %v572
      %v729 = vpack.c.b16 %v579, %v573
      %v730 = vpack.c.b16 %v580, %v574
      %v731 = vpack.c.b16 %v581, %v575
      %v732 = vpack.c.b16 %v582, %v576
      %v733 = vpack.c.b16 %v583, %v577
      %v734 = vpack.c.b16 %v590, %v584
      %v735 = vpack.c.b16 %v591, %v585
      %v736 = vpack.c.b16 %v592, %v586
      %v737 = vpack.c.b16 %v593, %v587
      %v738 = vpack.c.b16 %v594, %v588
      %v739 = vpack.c.b16 %v595, %v589
      %v740 = vpack.c.b16 %v602, %v596
      %v741 = vpack.c.b16 %v603, %v597
      %v742 = vpack.c.b16 %v604, %v598
      %v743 = vpack.c.b16 %v605, %v599
      %v744 = vpack.c.b16 %v606, %v600
      %v745 = vpack.c.b16 %v607, %v601
      %v746 = vpack.c.b16 %v614, %v608
      %v747 = vpack.c.b16 %v615, %v609
      %v748 = vpack.c.b16 %v616, %v610
      %v749 = vpack.c.b16 %v617, %v611
      %v750 = vpack.c.b16 %v618, %v612
      %v751 = vpack.c.b16 %v619, %v613
      %v752 = vpack.c.b16 %v626, %v620
      %v753 = vpack.c.b16 %v627, %v621
      %v754 = vpack.c.b16 %v628, %v622
      %v755 = vpack.c.b16 %v629, %v623
      %v756 = vpack.c.b16 %v630, %v624
      %v757 = vpack.c.b16 %v631, %v625
      %v758 = vpack.c.b16 %v638, %v632
      %v759 = vpack.c.b16 %v639, %v633
      %v760 = vpack.c.b16 %v640, %v634
      %v761 = vpack.c.b16 %v641, %v635
      %v762 = vpack.c.b16 %v642, %v636
      %v763 = vpack.c.b16 %v643, %v637
      %v764 = vpack.c.b16 %v650, %v644
      %v765 = vpack.c.b16 %v651, %v645
      %v766 = vpack.c.b16 %v652, %v646
      %v767 = vpack.c.b16 %v653, %v647
      %v768 = vpack.c.b16 %v654, %v648
      %v769 = vpack.c.b16 %v655, %v649
      %v770 = vpack.c.b16 %v662, %v656
      %v771 = vpack.c.b16 %v663, %v657
      %v772 = vpack.c.b16 %v664, %v658
      %v773 = vpack.c.b16 %v665, %v659
      %v774 = vpack.c.b16 %v666, %v660
      %v775 = vpack.c.b16 %v667, %v661
      %v776 = vpack.c.b16 %v674, %v668
      %v777 = vpack.c.b16 %v675, %v669
      %v778 = vpack.c.b16 %v676, %v670
      %v779 = vpack.c.b16 %v677, %v671
      %v780 = vpack.c.b16 %v678, %v672
      %v781 = vpack.c.b16 %v679, %v673
      %v782 = vpack.c.b16 %v686, %v680
      %v783 = vpack.c.b16 %v687, %v681
      %v784 = vpack.c.b16 %v688, %v682
      %v785 = vpack.c.b16 %v689, %v683
      %v786 = vpack.c.b16 %v690, %v684
      %v787 = vpack.c.b16 %v691, %v685
      %v788 = vpack.c.b16 %v698, %v692
      %v789 = vpack.c.b16 %v699, %v693
      %v790 = vpack.c.b16 %v700, %v694
      %v791 = vpack.c.b16 %v701, %v695
      %v792 = vpack.c.b16 %v702, %v696
      %v793 = vpack.c.b16 %v703, %v697
      %v794 = vpack.c.b16 %v710, %v704
      %v795 = vpack.c.b16 %v711, %v705
      %v796 = vpack.c.b16 %v712, %v706
      %v797 = vpack.c.b16 %v713, %v707
      %v798 = vpack.c.b16 %v714, %v708
      %v799 = vpack.c.b16 %v715, %v709
      %v800 = vpack.c.b16 %v722, %v716
      %v801 = vpack.c.b16 %v723, %v717
      %v802 = vpack.c.b16 %v724, %v718
      %v803 = vpack.c.b16 %v725, %v719
      %v804 = vpack.c.b16 %v726, %v720
      %v805 = vpack.c.b16 %v727, %v721
      %vm884 = vcmask 654336
      %v886 = vsel %vm884, %v489, 0
      %v889 = vsel %vm884, %v491, 0
      %891 = vmatpush.bf16.msra.mxu0 %v770
      %892 = vmatpush.bf16.msra.mxu0 %v764
      %893 = vmatpush.bf16.msra.mxu0 %v758
      %894 = vmatpush.bf16.msra.mxu0 %v752
      %895 = vmatpush.bf16.msra.mxu0 %v746
      %896 = vmatpush.bf16.msra.mxu0 %v740
      %897 = vmatpush.bf16.msra.mxu0 %v734
      %898 = vmatpush.bf16.msra.mxu0 %v728
      %899 = vmatmul.bf16.gmra.mxu0 %v488
      %v900 = vpop.f32.mrf.mxu0
      %v901 = vadd.f32 0.0, %v900
      %v902 = vpop.f32.mrf.mxu0
      %v903 = vadd.f32 0.0, %v902
      %904 = vmatmul.bf16.gmra.mxu0 %v490
      %v905 = vpop.f32.mrf.mxu0
      %v906 = vadd.f32 0.0, %v905
      %v907 = vpop.f32.mrf.mxu0
      %v908 = vadd.f32 0.0, %v907
      %909 = vdwg.mxu0
      %910 = vmatpush.bf16.msra.mxu0 0
      %911 = vmatpush.bf16.msra.mxu0 0
      %912 = vmatpush.bf16.msra.mxu0 0
      %913 = vmatpush.bf16.msra.mxu0 %v800
      %914 = vmatpush.bf16.msra.mxu0 %v794
      %915 = vmatpush.bf16.msra.mxu0 %v788
      %916 = vmatpush.bf16.msra.mxu0 %v782
      %917 = vmatpush.bf16.msra.mxu0 %v776
      %918 = vmatmul.bf16.gmra.mxu0 %v886
      %v919 = vpop.f32.mrf.mxu0
      %v920 = vadd.f32 %v901, %v919
      %v921 = vpop.f32.mrf.mxu0
      %v922 = vadd.f32 %v903, %v921
      %923 = vmatmul.bf16.gmra.mxu0 %v889
      %v924 = vpop.f32.mrf.mxu0
      %v925 = vadd.f32 %v906, %v924
      %v926 = vpop.f32.mrf.mxu0
      %v927 = vadd.f32 %v908, %v926
      %928 = vdwg.mxu0
      %929 = vmatpush.bf16.msra.mxu0 %v771
      %930 = vmatpush.bf16.msra.mxu0 %v765
      %931 = vmatpush.bf16.msra.mxu0 %v759
      %932 = vmatpush.bf16.msra.mxu0 %v753
      %933 = vmatpush.bf16.msra.mxu0 %v747
      %934 = vmatpush.bf16.msra.mxu0 %v741
      %935 = vmatpush.bf16.msra.mxu0 %v735
      %936 = vmatpush.bf16.msra.mxu0 %v729
      %937 = vmatmul.bf16.gmra.mxu0 %v488
      %v938 = vpop.f32.mrf.mxu0
      %v939 = vadd.f32 0.0, %v938
      %v940 = vpop.f32.mrf.mxu0
      %v941 = vadd.f32 0.0, %v940
      %942 = vmatmul.bf16.gmra.mxu0 %v490
      %v943 = vpop.f32.mrf.mxu0
      %v944 = vadd.f32 0.0, %v943
      %v945 = vpop.f32.mrf.mxu0
      %v946 = vadd.f32 0.0, %v945
      %947 = vdwg.mxu0
      %948 = vmatpush.bf16.msra.mxu0 0
      %949 = vmatpush.bf16.msra.mxu0 0
      %950 = vmatpush.bf16.msra.mxu0 0
      %951 = vmatpush.bf16.msra.mxu0 %v801
      %952 = vmatpush.bf16.msra.mxu0 %v795
      %953 = vmatpush.bf16.msra.mxu0 %v789
      %954 = vmatpush.bf16.msra.mxu0 %v783
      %955 = vmatpush.bf16.msra.mxu0 %v777
      %956 = vmatmul.bf16.gmra.mxu0 %v886
      %v957 = vpop.f32.mrf.mxu0
      %v958 = vadd.f32 %v939, %v957
      %v959 = vpop.f32.mrf.mxu0
      %v960 = vadd.f32 %v941, %v959
      %961 = vmatmul.bf16.gmra.mxu0 %v889
      %v962 = vpop.f32.mrf.mxu0
      %v963 = vadd.f32 %v944, %v962
      %v964 = vpop.f32.mrf.mxu0
      %v965 = vadd.f32 %v946, %v964
      %966 = vdwg.mxu0
      %967 = vmatpush.bf16.msra.mxu0 %v772
      %968 = vmatpush.bf16.msra.mxu0 %v766
      %969 = vmatpush.bf16.msra.mxu0 %v760
      %970 = vmatpush.bf16.msra.mxu0 %v754
      %971 = vmatpush.bf16.msra.mxu0 %v748
      %972 = vmatpush.bf16.msra.mxu0 %v742
      %973 = vmatpush.bf16.msra.mxu0 %v736
      %974 = vmatpush.bf16.msra.mxu0 %v730
      %975 = vmatmul.bf16.gmra.mxu0 %v488
      %v976 = vpop.f32.mrf.mxu0
      %v977 = vadd.f32 0.0, %v976
      %v978 = vpop.f32.mrf.mxu0
      %v979 = vadd.f32 0.0, %v978
      %980 = vmatmul.bf16.gmra.mxu0 %v490
      %v981 = vpop.f32.mrf.mxu0
      %v982 = vadd.f32 0.0, %v981
      %v983 = vpop.f32.mrf.mxu0
      %v984 = vadd.f32 0.0, %v983
      %985 = vdwg.mxu0
      %986 = vmatpush.bf16.msra.mxu0 0
      %987 = vmatpush.bf16.msra.mxu0 0
      %988 = vmatpush.bf16.msra.mxu0 0
      %989 = vmatpush.bf16.msra.mxu0 %v802
      %990 = vmatpush.bf16.msra.mxu0 %v796
      %991 = vmatpush.bf16.msra.mxu0 %v790
      %992 = vmatpush.bf16.msra.mxu0 %v784
      %993 = vmatpush.bf16.msra.mxu0 %v778
      %994 = vmatmul.bf16.gmra.mxu0 %v886
      %v995 = vpop.f32.mrf.mxu0
      %v996 = vadd.f32 %v977, %v995
      %v997 = vpop.f32.mrf.mxu0
      %v998 = vadd.f32 %v979, %v997
      %999 = vmatmul.bf16.gmra.mxu0 %v889
      %v1000 = vpop.f32.mrf.mxu0
      %v1001 = vadd.f32 %v982, %v1000
      %v1002 = vpop.f32.mrf.mxu0
      %v1003 = vadd.f32 %v984, %v1002
      %1004 = vdwg.mxu0
      %1005 = vmatpush.bf16.msra.mxu0 %v773
      %1006 = vmatpush.bf16.msra.mxu0 %v767
      %1007 = vmatpush.bf16.msra.mxu0 %v761
      %1008 = vmatpush.bf16.msra.mxu0 %v755
      %1009 = vmatpush.bf16.msra.mxu0 %v749
      %1010 = vmatpush.bf16.msra.mxu0 %v743
      %1011 = vmatpush.bf16.msra.mxu0 %v737
      %1012 = vmatpush.bf16.msra.mxu0 %v731
      %1013 = vmatmul.bf16.gmra.mxu0 %v488
      %v1014 = vpop.f32.mrf.mxu0
      %v1015 = vadd.f32 0.0, %v1014
      %v1016 = vpop.f32.mrf.mxu0
      %v1017 = vadd.f32 0.0, %v1016
      %1018 = vmatmul.bf16.gmra.mxu0 %v490
      %v1019 = vpop.f32.mrf.mxu0
      %v1020 = vadd.f32 0.0, %v1019
      %v1021 = vpop.f32.mrf.mxu0
      %v1022 = vadd.f32 0.0, %v1021
      %1023 = vdwg.mxu0
      %1024 = vmatpush.bf16.msra.mxu0 0
      %1025 = vmatpush.bf16.msra.mxu0 0
      %1026 = vmatpush.bf16.msra.mxu0 0
      %1027 = vmatpush.bf16.msra.mxu0 %v803
      %1028 = vmatpush.bf16.msra.mxu0 %v797
      %1029 = vmatpush.bf16.msra.mxu0 %v791
      %1030 = vmatpush.bf16.msra.mxu0 %v785
      %1031 = vmatpush.bf16.msra.mxu0 %v779
      %1032 = vmatmul.bf16.gmra.mxu0 %v886
      %v1033 = vpop.f32.mrf.mxu0
      %v1034 = vadd.f32 %v1015, %v1033
      %v1035 = vpop.f32.mrf.mxu0
      %v1036 = vadd.f32 %v1017, %v1035
      %1037 = vmatmul.bf16.gmra.mxu0 %v889
      %v1038 = vpop.f32.mrf.mxu0
      %v1039 = vadd.f32 %v1020, %v1038
      %v1040 = vpop.f32.mrf.mxu0
      %v1041 = vadd.f32 %v1022, %v1040
      %1042 = vdwg.mxu0
      %1043 = vmatpush.bf16.msra.mxu0 %v774
      %1044 = vmatpush.bf16.msra.mxu0 %v768
      %1045 = vmatpush.bf16.msra.mxu0 %v762
      %1046 = vmatpush.bf16.msra.mxu0 %v756
      %1047 = vmatpush.bf16.msra.mxu0 %v750
      %1048 = vmatpush.bf16.msra.mxu0 %v744
      %1049 = vmatpush.bf16.msra.mxu0 %v738
      %1050 = vmatpush.bf16.msra.mxu0 %v732
      %1051 = vmatmul.bf16.gmra.mxu0 %v488
      %v1052 = vpop.f32.mrf.mxu0
      %v1053 = vadd.f32 0.0, %v1052
      %v1054 = vpop.f32.mrf.mxu0
      %v1055 = vadd.f32 0.0, %v1054
      %1056 = vmatmul.bf16.gmra.mxu0 %v490
      %v1057 = vpop.f32.mrf.mxu0
      %v1058 = vadd.f32 0.0, %v1057
      %v1059 = vpop.f32.mrf.mxu0
      %v1060 = vadd.f32 0.0, %v1059
      %1061 = vdwg.mxu0
      %1062 = vmatpush.bf16.msra.mxu0 0
      %1063 = vmatpush.bf16.msra.mxu0 0
      %1064 = vmatpush.bf16.msra.mxu0 0
      %1065 = vmatpush.bf16.msra.mxu0 %v804
      %1066 = vmatpush.bf16.msra.mxu0 %v798
      %1067 = vmatpush.bf16.msra.mxu0 %v792
      %1068 = vmatpush.bf16.msra.mxu0 %v786
      %1069 = vmatpush.bf16.msra.mxu0 %v780
      %1070 = vmatmul.bf16.gmra.mxu0 %v886
      %v1071 = vpop.f32.mrf.mxu0
      %v1072 = vadd.f32 %v1053, %v1071
      %v1073 = vpop.f32.mrf.mxu0
      %v1074 = vadd.f32 %v1055, %v1073
      %1075 = vmatmul.bf16.gmra.mxu0 %v889
      %v1076 = vpop.f32.mrf.mxu0
      %v1077 = vadd.f32 %v1058, %v1076
      %v1078 = vpop.f32.mrf.mxu0
      %v1079 = vadd.f32 %v1060, %v1078
      %1080 = vdwg.mxu0
      %1081 = vmatpush.bf16.msra.mxu0 %v775
      %1082 = vmatpush.bf16.msra.mxu0 %v769
      %1083 = vmatpush.bf16.msra.mxu0 %v763
      %1084 = vmatpush.bf16.msra.mxu0 %v757
      %1085 = vmatpush.bf16.msra.mxu0 %v751
      %1086 = vmatpush.bf16.msra.mxu0 %v745
      %1087 = vmatpush.bf16.msra.mxu0 %v739
      %1088 = vmatpush.bf16.msra.mxu0 %v733
      %1089 = vmatmul.bf16.gmra.mxu0 %v488
      %v1090 = vpop.f32.mrf.mxu0
      %v1091 = vadd.f32 0.0, %v1090
      %v1092 = vpop.f32.mrf.mxu0
      %v1093 = vadd.f32 0.0, %v1092
      %1094 = vmatmul.bf16.gmra.mxu0 %v490
      %v1095 = vpop.f32.mrf.mxu0
      %v1096 = vadd.f32 0.0, %v1095
      %v1097 = vpop.f32.mrf.mxu0
      %v1098 = vadd.f32 0.0, %v1097
      %1099 = vdwg.mxu0
      %1100 = vmatpush.bf16.msra.mxu0 0
      %1101 = vmatpush.bf16.msra.mxu0 0
      %1102 = vmatpush.bf16.msra.mxu0 0
      %1103 = vmatpush.bf16.msra.mxu0 %v805
      %1104 = vmatpush.bf16.msra.mxu0 %v799
      %1105 = vmatpush.bf16.msra.mxu0 %v793
      %1106 = vmatpush.bf16.msra.mxu0 %v787
      %1107 = vmatpush.bf16.msra.mxu0 %v781
      %1108 = vmatmul.bf16.gmra.mxu0 %v886
      %v1109 = vpop.f32.mrf.mxu0
      %v1110 = vadd.f32 %v1091, %v1109
      %v1111 = vpop.f32.mrf.mxu0
      %v1112 = vadd.f32 %v1093, %v1111
      %1113 = vmatmul.bf16.gmra.mxu0 %v889
      %v1114 = vpop.f32.mrf.mxu0
      %v1115 = vadd.f32 %v1096, %v1114
      %v1116 = vpop.f32.mrf.mxu0
      %v1117 = vadd.f32 %v1098, %v1116
      %1118 = vdwg.mxu0
      %v1119 = vmax.f32 %v920, %v996
      %v1120 = vmax.f32 %v958, %v1034
      %v1121 = vmax.f32 %v922, %v998
      %v1122 = vmax.f32 %v960, %v1036
      %v1123 = vmax.f32 %v925, %v1001
      %v1124 = vmax.f32 %v963, %v1039
      %v1125 = vmax.f32 %v927, %v1003
      %v1126 = vmax.f32 %v965, %v1041
      %v1127 = vmax.f32 %v1119, %v1120
      %v1128 = vmax.f32 %v1121, %v1122
      %v1129 = vmax.f32 %v1123, %v1124
      %v1130 = vmax.f32 %v1125, %v1126
      %1135 = vrot.lane.b32.xlu0 %v1127, 64
      %v1136 = vpop.permute.xlu0 %1135
      %1137 = vrot.lane.b32.xlu0 %v1128, 64
      %v1138 = vpop.permute.xlu0 %1137
      %1139 = vrot.lane.b32.xlu0 %v1129, 64
      %v1140 = vpop.permute.xlu0 %1139
      %1141 = vrot.lane.b32.xlu0 %v1130, 64
      %v1142 = vpop.permute.xlu0 %1141
      %v1147 = vmax.f32 %v1127, %v1136
      %v1148 = vmax.f32 %v1128, %v1138
      %v1149 = vmax.f32 %v1129, %v1140
      %v1150 = vmax.f32 %v1130, %v1142
      %1155 = vrot.lane.b32.xlu0 %v1147, 96
      %v1156 = vpop.permute.xlu0 %1155
      %1157 = vrot.lane.b32.xlu0 %v1148, 96
      %v1158 = vpop.permute.xlu0 %1157
      %1159 = vrot.lane.b32.xlu0 %v1149, 96
      %v1160 = vpop.permute.xlu0 %1159
      %1161 = vrot.lane.b32.xlu0 %v1150, 96
      %v1162 = vpop.permute.xlu0 %1161
      %v1167 = vmax.f32 %v1147, %v1156
      %v1168 = vmax.f32 %v1148, %v1158
      %v1169 = vmax.f32 %v1149, %v1160
      %v1170 = vmax.f32 %v1150, %v1162
      %v1171 = vmax.f32 %v1167, 0.0
      %v1172 = vmax.f32 %v1168, 0.0
      %v1173 = vmax.f32 %v1169, 0.0
      %v1174 = vmax.f32 %v1170, 0.0
      %v1175 = vpack.c.bf16 %v1172, %v1171
      %v1176 = vpack.c.bf16 %v1174, %v1173
      %v1177 = vld [vmem:[%s2] sm:$0xff]
      %v1178 = vld [vmem:[%s2 + $0x8] sm:$0xff]
      %v1179 = vld [vmem:[%s2 + $0x10] sm:$0xff]
      %v1180 = vld [vmem:[%s2 + $0x18] sm:$0xff]
      %v1185 = vunpack.c.l.b16 %v1177
      %v1186 = vunpack.c.h.b16 %v1177
      %v1187 = vunpack.c.l.b16 %v1178
      %v1188 = vunpack.c.h.b16 %v1178
      %v1189 = vunpack.c.l.b16 %v1179
      %v1190 = vunpack.c.h.b16 %v1179
      %v1191 = vunpack.c.l.b16 %v1180
      %v1192 = vunpack.c.h.b16 %v1180
      %v1193 = vpack.c.b16 %v1187, %v1185
      %v1194 = vpack.c.b16 %v1188, %v1186
      %v1195 = vpack.c.b16 %v1191, %v1189
      %v1196 = vpack.c.b16 %v1192, %v1190
      %vm1201 = vcmask 261120
      %v1203 = vsel %vm1201, %v1175, 0
      %v1206 = vsel %vm1201, %v1176, 0
      %1208 = vmatpush.bf16.msra.mxu0 0
      %1209 = vmatpush.bf16.msra.mxu0 0
      %1210 = vmatpush.bf16.msra.mxu0 0
      %1211 = vmatpush.bf16.msra.mxu0 0
      %1212 = vmatpush.bf16.msra.mxu0 0
      %1213 = vmatpush.bf16.msra.mxu0 0
      %1214 = vmatpush.bf16.msra.mxu0 %v1195
      %1215 = vmatpush.bf16.msra.mxu0 %v1193
      %1216 = vmatmul.bf16.gmra.mxu0 %v1203
      %v1217 = vpop.f32.mrf.mxu0
      %v1218 = vadd.f32 %v1072, %v1217
      %v1219 = vpop.f32.mrf.mxu0
      %v1220 = vadd.f32 %v1074, %v1219
      %1221 = vmatmul.bf16.gmra.mxu0 %v1206
      %v1222 = vpop.f32.mrf.mxu0
      %v1223 = vadd.f32 %v1077, %v1222
      %v1224 = vpop.f32.mrf.mxu0
      %v1225 = vadd.f32 %v1079, %v1224
      %1226 = vdwg.mxu0
      %1227 = vmatpush.bf16.msra.mxu0 0
      %1228 = vmatpush.bf16.msra.mxu0 0
      %1229 = vmatpush.bf16.msra.mxu0 0
      %1230 = vmatpush.bf16.msra.mxu0 0
      %1231 = vmatpush.bf16.msra.mxu0 0
      %1232 = vmatpush.bf16.msra.mxu0 0
      %1233 = vmatpush.bf16.msra.mxu0 %v1196
      %1234 = vmatpush.bf16.msra.mxu0 %v1194
      %1235 = vmatmul.bf16.gmra.mxu0 %v1203
      %v1236 = vpop.f32.mrf.mxu0
      %v1237 = vadd.f32 %v1110, %v1236
      %v1238 = vpop.f32.mrf.mxu0
      %v1239 = vadd.f32 %v1112, %v1238
      %1240 = vmatmul.bf16.gmra.mxu0 %v1206
      %v1241 = vpop.f32.mrf.mxu0
      %v1242 = vadd.f32 %v1115, %v1241
      %v1243 = vpop.f32.mrf.mxu0
      %v1244 = vadd.f32 %v1117, %v1243
      %1245 = vdwg.mxu0
      %v1246 = vmax.f32 %v1218, 0.0
      %v1247 = vmax.f32 %v1237, 0.0
      %v1248 = vmax.f32 %v1220, 0.0
      %v1249 = vmax.f32 %v1239, 0.0
      %v1250 = vmax.f32 %v1223, 0.0
      %v1251 = vmax.f32 %v1242, 0.0
      %v1252 = vmax.f32 %v1225, 0.0
      %v1253 = vmax.f32 %v1244, 0.0
      %v1254 = vpack.c.bf16 %v1248, %v1246
      %v1255 = vpack.c.bf16 %v1249, %v1247
      %v1256 = vpack.c.bf16 %v1252, %v1250
      %v1257 = vpack.c.bf16 %v1253, %v1251
      %v1258 = vld [vmem:[%s3] sm:$0xf]
      %v1259 = vld [vmem:[%s3 + $0x4] sm:$0xf]
      %v1260 = vld [vmem:[%s3 + $0x8] sm:$0xf]
      %v1261 = vld [vmem:[%s3 + $0xc] sm:$0xf]
      %v1262 = vld [vmem:[%s3 + $0x10] sm:$0xf]
      %v1263 = vld [vmem:[%s3 + $0x14] sm:$0xf]
      %v1264 = vld [vmem:[%s3 + $0x18] sm:$0xf]
      %v1265 = vld [vmem:[%s3 + $0x1c] sm:$0xf]
      %v1266 = vld [vmem:[%s3 + $0x20] sm:$0xf]
      %v1267 = vld [vmem:[%s3 + $0x24] sm:$0xf]
      %v1268 = vld [vmem:[%s3 + $0x28] sm:$0xf]
      %v1269 = vld [vmem:[%s3 + $0x2c] sm:$0xf]
      %v1270 = vld [vmem:[%s3 + $0x30] sm:$0xf]
      %v1271 = vld [vmem:[%s3 + $0x34] sm:$0xf]
      %v1272 = vld [vmem:[%s3 + $0x38] sm:$0xf]
      %v1273 = vld [vmem:[%s3 + $0x3c] sm:$0xf]
      %v1274 = vld [vmem:[%s3 + $0x40] sm:$0xf]
      %v1275 = vld [vmem:[%s3 + $0x44] sm:$0xf]
      %v1276 = vld [vmem:[%s3 + $0x48] sm:$0xf]
      %v1277 = vld [vmem:[%s3 + $0x4c] sm:$0xf]
      %v1278 = vld [vmem:[%s3 + $0x50] sm:$0xf]
      %v1279 = vld [vmem:[%s3 + $0x54] sm:$0xf]
      %v1280 = vld [vmem:[%s3 + $0x58] sm:$0xf]
      %v1281 = vld [vmem:[%s3 + $0x5c] sm:$0xf]
      %v1282 = vld [vmem:[%s3 + $0x60] sm:$0xf]
      %v1283 = vld [vmem:[%s3 + $0x64] sm:$0xf]
      %v1284 = vld [vmem:[%s3 + $0x68] sm:$0xf]
      %v1285 = vld [vmem:[%s3 + $0x6c] sm:$0xf]
      %v1286 = vld [vmem:[%s3 + $0x70] sm:$0xf]
      %v1287 = vld [vmem:[%s3 + $0x74] sm:$0xf]
      %v1288 = vld [vmem:[%s3 + $0x78] sm:$0xf]
      %v1289 = vld [vmem:[%s3 + $0x7c] sm:$0xf]
      %v1290 = vld [vmem:[%s4] sm:$0x1]
      %v1292 = vperm.slane %v1290, 0
      %v1326 = vunpack.c.l.b16 %v1258
      %v1327 = vunpack.c.l.b16 %v1259
      %v1328 = vunpack.c.l.b16 %v1260
      %v1329 = vunpack.c.l.b16 %v1261
      %v1330 = vunpack.c.l.b16 %v1262
      %v1331 = vunpack.c.l.b16 %v1263
      %v1332 = vunpack.c.l.b16 %v1264
      %v1333 = vunpack.c.l.b16 %v1265
      %v1334 = vunpack.c.l.b16 %v1266
      %v1335 = vunpack.c.l.b16 %v1267
      %v1336 = vunpack.c.l.b16 %v1268
      %v1337 = vunpack.c.l.b16 %v1269
      %v1338 = vunpack.c.l.b16 %v1270
      %v1339 = vunpack.c.l.b16 %v1271
      %v1340 = vunpack.c.l.b16 %v1272
      %v1341 = vunpack.c.l.b16 %v1273
      %v1342 = vunpack.c.l.b16 %v1274
      %v1343 = vunpack.c.l.b16 %v1275
      %v1344 = vunpack.c.l.b16 %v1276
      %v1345 = vunpack.c.l.b16 %v1277
      %v1346 = vunpack.c.l.b16 %v1278
      %v1347 = vunpack.c.l.b16 %v1279
      %v1348 = vunpack.c.l.b16 %v1280
      %v1349 = vunpack.c.l.b16 %v1281
      %v1350 = vunpack.c.l.b16 %v1282
      %v1351 = vunpack.c.l.b16 %v1283
      %v1352 = vunpack.c.l.b16 %v1284
      %v1353 = vunpack.c.l.b16 %v1285
      %v1354 = vunpack.c.l.b16 %v1286
      %v1355 = vunpack.c.l.b16 %v1287
      %v1356 = vunpack.c.l.b16 %v1288
      %v1357 = vunpack.c.l.b16 %v1289
      %v1358 = vpack.c.b16 %v1327, %v1326
      %v1359 = vpack.c.b16 %v1329, %v1328
      %v1360 = vpack.c.b16 %v1331, %v1330
      %v1361 = vpack.c.b16 %v1333, %v1332
      %v1362 = vpack.c.b16 %v1335, %v1334
      %v1363 = vpack.c.b16 %v1337, %v1336
      %v1364 = vpack.c.b16 %v1339, %v1338
      %v1365 = vpack.c.b16 %v1341, %v1340
      %v1366 = vpack.c.b16 %v1343, %v1342
      %v1367 = vpack.c.b16 %v1345, %v1344
      %v1368 = vpack.c.b16 %v1347, %v1346
      %v1369 = vpack.c.b16 %v1349, %v1348
      %v1370 = vpack.c.b16 %v1351, %v1350
      %v1371 = vpack.c.b16 %v1353, %v1352
      %v1372 = vpack.c.b16 %v1355, %v1354
      %v1373 = vpack.c.b16 %v1357, %v1356
      %1390 = vmatpush.bf16.msra.mxu0 %v1365
      %1391 = vmatpush.bf16.msra.mxu0 %v1364
      %1392 = vmatpush.bf16.msra.mxu0 %v1363
      %1393 = vmatpush.bf16.msra.mxu0 %v1362
      %1394 = vmatpush.bf16.msra.mxu0 %v1361
      %1395 = vmatpush.bf16.msra.mxu0 %v1360
      %1396 = vmatpush.bf16.msra.mxu0 %v1359
      %1397 = vmatpush.bf16.msra.mxu0 %v1358
      %1398 = vmatmul.bf16.gmra.mxu0 %v1254
      %v1399 = vpop.f32.mrf.mxu0
      %v1400 = vadd.f32 %v1292, %v1399
      %v1401 = vpop.f32.mrf.mxu0
      %v1402 = vadd.f32 %v1292, %v1401
      %1403 = vmatmul.bf16.gmra.mxu0 %v1256
      %v1404 = vpop.f32.mrf.mxu0
      %v1405 = vadd.f32 %v1292, %v1404
      %v1406 = vpop.f32.mrf.mxu0
      %v1407 = vadd.f32 %v1292, %v1406
      %1408 = vdwg.mxu0
      %1409 = vmatpush.bf16.msra.mxu0 %v1373
      %1410 = vmatpush.bf16.msra.mxu0 %v1372
      %1411 = vmatpush.bf16.msra.mxu0 %v1371
      %1412 = vmatpush.bf16.msra.mxu0 %v1370
      %1413 = vmatpush.bf16.msra.mxu0 %v1369
      %1414 = vmatpush.bf16.msra.mxu0 %v1368
      %1415 = vmatpush.bf16.msra.mxu0 %v1367
      %1416 = vmatpush.bf16.msra.mxu0 %v1366
      %1417 = vmatmul.bf16.gmra.mxu0 %v1255
      %v1418 = vpop.f32.mrf.mxu0
      %v1419 = vadd.f32 %v1400, %v1418
      %v1420 = vpop.f32.mrf.mxu0
      %v1421 = vadd.f32 %v1402, %v1420
      %1422 = vmatmul.bf16.gmra.mxu0 %v1257
      %v1423 = vpop.f32.mrf.mxu0
      %v1424 = vadd.f32 %v1405, %v1423
      %v1425 = vpop.f32.mrf.mxu0
      %v1426 = vadd.f32 %v1407, %v1425
      %1427 = vdwg.mxu0
      %v1428 = vmax.f32 %v1419, 0.0
      %v1429 = vmax.f32 %v1421, 0.0
      %v1430 = vmax.f32 %v1424, 0.0
      %v1431 = vmax.f32 %v1426, 0.0
      %v1432 = vpack.c.bf16 %v1429, %v1428
      %v1433 = vpack.c.bf16 %v1431, %v1430
      %v1434 = vld [vmem:[%s5] sm:$0xf]
      %v1435 = vld [vmem:[%s5 + $0x4] sm:$0xf]
      %v1436 = vld [vmem:[%s5 + $0x8] sm:$0xf]
      %v1437 = vld [vmem:[%s5 + $0xc] sm:$0xf]
      %v1438 = vld [vmem:[%s5 + $0x10] sm:$0xf]
      %v1439 = vld [vmem:[%s5 + $0x14] sm:$0xf]
      %v1440 = vld [vmem:[%s5 + $0x18] sm:$0xf]
      %v1441 = vld [vmem:[%s5 + $0x1c] sm:$0xf]
      %v1442 = vld [vmem:[%s5 + $0x20] sm:$0xf]
      %v1443 = vld [vmem:[%s5 + $0x24] sm:$0xf]
      %v1444 = vld [vmem:[%s5 + $0x28] sm:$0xf]
      %v1445 = vld [vmem:[%s5 + $0x2c] sm:$0xf]
      %v1446 = vld [vmem:[%s5 + $0x30] sm:$0xf]
      %v1447 = vld [vmem:[%s5 + $0x34] sm:$0xf]
      %v1448 = vld [vmem:[%s5 + $0x38] sm:$0xf]
      %v1449 = vld [vmem:[%s5 + $0x3c] sm:$0xf]
      %v1450 = vld [vmem:[%s6] sm:$0x1]
      %v1452 = vperm.slane %v1450, 0
      %v1470 = vunpack.c.l.b16 %v1434
      %v1471 = vunpack.c.l.b16 %v1435
      %v1472 = vunpack.c.l.b16 %v1436
      %v1473 = vunpack.c.l.b16 %v1437
      %v1474 = vunpack.c.l.b16 %v1438
      %v1475 = vunpack.c.l.b16 %v1439
      %v1476 = vunpack.c.l.b16 %v1440
      %v1477 = vunpack.c.l.b16 %v1441
      %v1478 = vunpack.c.l.b16 %v1442
      %v1479 = vunpack.c.l.b16 %v1443
      %v1480 = vunpack.c.l.b16 %v1444
      %v1481 = vunpack.c.l.b16 %v1445
      %v1482 = vunpack.c.l.b16 %v1446
      %v1483 = vunpack.c.l.b16 %v1447
      %v1484 = vunpack.c.l.b16 %v1448
      %v1485 = vunpack.c.l.b16 %v1449
      %v1486 = vpack.c.b16 %v1471, %v1470
      %v1487 = vpack.c.b16 %v1473, %v1472
      %v1488 = vpack.c.b16 %v1475, %v1474
      %v1489 = vpack.c.b16 %v1477, %v1476
      %v1490 = vpack.c.b16 %v1479, %v1478
      %v1491 = vpack.c.b16 %v1481, %v1480
      %v1492 = vpack.c.b16 %v1483, %v1482
      %v1493 = vpack.c.b16 %v1485, %v1484
      %1502 = vmatpush.bf16.msra.mxu0 %v1493
      %1503 = vmatpush.bf16.msra.mxu0 %v1492
      %1504 = vmatpush.bf16.msra.mxu0 %v1491
      %1505 = vmatpush.bf16.msra.mxu0 %v1490
      %1506 = vmatpush.bf16.msra.mxu0 %v1489
      %1507 = vmatpush.bf16.msra.mxu0 %v1488
      %1508 = vmatpush.bf16.msra.mxu0 %v1487
      %1509 = vmatpush.bf16.msra.mxu0 %v1486
      %1510 = vmatmul.bf16.gmra.mxu0 %v1432
      %v1511 = vpop.f32.mrf.mxu0
      %v1512 = vadd.f32 %v1452, %v1511
      %v1513 = vpop.f32.mrf.mxu0
      %v1514 = vadd.f32 %v1452, %v1513
      %1515 = vmatmul.bf16.gmra.mxu0 %v1433
      %v1516 = vpop.f32.mrf.mxu0
      %v1517 = vadd.f32 %v1452, %v1516
      %v1518 = vpop.f32.mrf.mxu0
      %v1519 = vadd.f32 %v1452, %v1518
      %1520 = vdwg.mxu0
      %v1521 = vmax.f32 %v1512, 0.0
      %v1522 = vmax.f32 %v1514, 0.0
      %v1523 = vmax.f32 %v1517, 0.0
      %v1524 = vmax.f32 %v1519, 0.0
      %v1525 = vpack.c.bf16 %v1522, %v1521
      %v1526 = vpack.c.bf16 %v1524, %v1523
      %v1527 = vld [vmem:[%s7] sm:$0xf]
      %v1528 = vld [vmem:[%s7 + $0x4] sm:$0xf]
      %v1529 = vld [vmem:[%s7 + $0x8] sm:$0xf]
      %v1530 = vld [vmem:[%s7 + $0xc] sm:$0xf]
      %v1531 = vld [vmem:[%s7 + $0x10] sm:$0xf]
      %v1532 = vld [vmem:[%s7 + $0x14] sm:$0xf]
      %v1533 = vld [vmem:[%s7 + $0x18] sm:$0xf]
      %v1534 = vld [vmem:[%s7 + $0x1c] sm:$0xf]
      %v1535 = vld [vmem:[%s8] sm:$0x1]
      %v1537 = vperm.slane %v1535, 0
      %v1547 = vunpack.c.l.b16 %v1527
      %v1548 = vunpack.c.l.b16 %v1528
      %v1549 = vunpack.c.l.b16 %v1529
      %v1550 = vunpack.c.l.b16 %v1530
      %v1551 = vunpack.c.l.b16 %v1531
      %v1552 = vunpack.c.l.b16 %v1532
      %v1553 = vunpack.c.l.b16 %v1533
      %v1554 = vunpack.c.l.b16 %v1534
      %v1555 = vpack.c.b16 %v1548, %v1547
      %v1556 = vpack.c.b16 %v1550, %v1549
      %v1557 = vpack.c.b16 %v1552, %v1551
      %v1558 = vpack.c.b16 %v1554, %v1553
      %vm1563 = vcmask 523264
      %v1565 = vsel %vm1563, %v1525, 0
      %v1568 = vsel %vm1563, %v1526, 0
      %1570 = vmatpush.bf16.msra.mxu0 0
      %1571 = vmatpush.bf16.msra.mxu0 0
      %1572 = vmatpush.bf16.msra.mxu0 0
      %1573 = vmatpush.bf16.msra.mxu0 0
      %1574 = vmatpush.bf16.msra.mxu0 %v1558
      %1575 = vmatpush.bf16.msra.mxu0 %v1557
      %1576 = vmatpush.bf16.msra.mxu0 %v1556
      %1577 = vmatpush.bf16.msra.mxu0 %v1555
      %1578 = vmatmul.bf16.gmra.mxu0 %v1565
      %v1579 = vpop.f32.mrf.mxu0
      %v1580 = vadd.f32 %v1537, %v1579
      %v1581 = vpop.f32.mrf.mxu0
      %v1582 = vadd.f32 %v1537, %v1581
      %1583 = vmatmul.bf16.gmra.mxu0 %v1568
      %v1584 = vpop.f32.mrf.mxu0
      %v1585 = vadd.f32 %v1537, %v1584
      %v1586 = vpop.f32.mrf.mxu0
      %v1587 = vadd.f32 %v1537, %v1586
      %1588 = vdwg.mxu0
      %v1589 = vmax.f32 %v1580, 0.0
      %v1590 = vmax.f32 %v1582, 0.0
      %v1591 = vmax.f32 %v1585, 0.0
      %v1592 = vmax.f32 %v1587, 0.0
      %v1593 = vpack.c.bf16 %v1590, %v1589
      %v1594 = vpack.c.bf16 %v1592, %v1591
      %v1595 = vld [vmem:[%s9] sm:$0xf]
      %v1596 = vld [vmem:[%s9 + $0x4] sm:$0xf]
      %v1597 = vld [vmem:[%s9 + $0x8] sm:$0xf]
      %v1598 = vld [vmem:[%s9 + $0xc] sm:$0xf]
      %v1599 = vld [vmem:[%s10] sm:$0x1]
      %v1601 = vperm.slane %v1599, 0
      %v1607 = vunpack.c.l.b16 %v1595
      %v1608 = vunpack.c.l.b16 %v1596
      %v1609 = vunpack.c.l.b16 %v1597
      %v1610 = vunpack.c.l.b16 %v1598
      %v1611 = vpack.c.b16 %v1608, %v1607
      %v1612 = vpack.c.b16 %v1610, %v1609
      %v1616 = vsel %vm1201, %v1593, 0
      %v1619 = vsel %vm1201, %v1594, 0
      %1621 = vmatpush.bf16.msra.mxu0 0
      %1622 = vmatpush.bf16.msra.mxu0 0
      %1623 = vmatpush.bf16.msra.mxu0 0
      %1624 = vmatpush.bf16.msra.mxu0 0
      %1625 = vmatpush.bf16.msra.mxu0 0
      %1626 = vmatpush.bf16.msra.mxu0 0
      %1627 = vmatpush.bf16.msra.mxu0 %v1612
      %1628 = vmatpush.bf16.msra.mxu0 %v1611
      %1629 = vmatmul.bf16.gmra.mxu0 %v1616
      %v1630 = vpop.f32.mrf.mxu0
      %v1631 = vadd.f32 %v1601, %v1630
      %v1632 = vpop.f32.mrf.mxu0
      %v1633 = vadd.f32 %v1601, %v1632
      %1634 = vmatmul.bf16.gmra.mxu0 %v1619
      %v1635 = vpop.f32.mrf.mxu0
      %v1636 = vadd.f32 %v1601, %v1635
      %v1637 = vpop.f32.mrf.mxu0
      %v1638 = vadd.f32 %v1601, %v1637
      %1639 = vdwg.mxu0
      %v1640 = vmax.f32 %v1631, 0.0
      %v1641 = vmax.f32 %v1633, 0.0
      %v1642 = vmax.f32 %v1636, 0.0
      %v1643 = vmax.f32 %v1638, 0.0
      %v1644 = vpack.c.bf16 %v1640, %v1640
      %v1645 = vpack.c.bf16 %v1641, %v1641
      %v1646 = vpack.c.bf16 %v1642, %v1642
      %v1647 = vpack.c.bf16 %v1643, %v1643
      %1648 = vst [vmem:[%s391] sm:$0xf] %v1644
      %1649 = vst [vmem:[%s391 + $0x4] sm:$0xf] %v1645
      %1650 = vst [vmem:[%s391 + $0x8] sm:$0xf] %v1646
      %1651 = vst [vmem:[%s391 + $0xc] sm:$0xf] %v1647
      %s1652 = smul.u32 4, %s22
      %p1653 = scmp.lt.s32.totalorder %s1652, 7
      %s1654 = scalar_select %p1653, %s1652, 7
      %s1655 = smul.addr %s1654, 4
      %s1656 = scalar_lea.vmem %s11, %s1655
      // Predicated region
      $region65: #{class_cnn_forward.1} parent=63 // pred_check
        %p1657 = pneg %p276
      $region66: #{class_cnn_forward.1} parent=63 // pred_check_branch
        %1659 = sbr.rel (%p1657) target = $region68
      $region67: #{class_cnn_forward.1} parent=63 // pred_region
        %s1660 = smul.u32 4, %s22
      $region68: #{class_cnn_forward.1} parent=63 // pred_fallthru
        _
    $region64: #{class_cnn_forward.1} parent=5 // pred_fallthru
      _
    %p1661 = scmp.le.s32.totalorder 2, %s17
    // Predicated region
    $region69: #{class_cnn_forward.1} parent=5 // pred_check
      %p1662 = pneg %p1661
    $region70: #{class_cnn_forward.1} parent=5 // pred_check_branch
      %1664 = sbr.rel (%p1662) target = $region72
    $region71: #{class_cnn_forward.1} parent=5 // pred_region
      %s1665 = ssub.s32 %s17, 2
      // Predicated region
      $region73: #{class_cnn_forward.1} parent=71 // pred_check
        %p1666 = pneg %p282
      $region74: #{class_cnn_forward.1} parent=71 // pred_check_branch
        %1668 = sbr.rel (%p1666) target = $region76
      $region75: #{class_cnn_forward.1} parent=71 // pred_region
        %s1669 = smul.u32 4, %s23
        %p1670 = scmp.lt.s32.totalorder %s1669, 7
        %s1671 = scalar_select %p1670, %s1669, 7
        %s1672 = smul.addr %s1671, 4
        %s1673 = scalar_lea.vmem %s11, %s1672
      $region76: #{class_cnn_forward.1} parent=71 // pred_fallthru
        _
    $region72: #{class_cnn_forward.1} parent=5 // pred_fallthru
      _
  $region6: #{class_cnn_forward.1} parent=0 // loop_footer
    %s21 = sadd.s32 1, %s17
  $region7: #{class_cnn_forward.1} parent=0 // loop_footer_branch
    %16 = sbr.rel target = $region3
  $region8: #{class_cnn_forward.1} parent=0 // loop_exit
    _

</llo_original>
